<compile_context>
chip_gen: v7x
topology: tpu7x:2x2x1
jax: 0.10.0
libtpu: 0.0.40
codegen_flags: <defaults>
</compile_context>

<pallas_src>
import functools

import jax
import jax.numpy as jnp
from jax import lax
from jax.experimental import pallas as pl
from jax.experimental.pallas import tpu as pltpu


# Tap order t = (oy+1)*3 + (ox+1) matches the (ky, kx) order of the OIHW weights.
_TAP_OFFSETS = tuple((oy, ox) for oy in (-1, 0, 1) for ox in (-1, 0, 1))


def _basic_block_kernel(x_ref, mask_ref, w1_ref, w2_ref, out_ref, patch_ref,
                        *, C, H, W, b_blk, K_pad):
    """One block of b_blk images per grid step.

    x_ref     : (b_blk, C, H*W) f32   flattened input (also the residual)
    mask_ref  : (9*C, H*W)      f32   {0,1} tap-validity masks, pre-broadcast over C
    w1_ref    : (C, K_pad)      bf16  conv1 weights, BN1 scale folded, bias column
    w2_ref    : (C, K_pad)      bf16  conv2 weights, BN2 scale folded, bias column
    out_ref   : (b_blk, C, H*W)
    patch_ref : (K_pad, b_blk*H*W) bf16 VMEM im2col scratch
    """
    HW = H * W
    K = 9 * C
    L = b_blk * HW

    # Tail rows of the im2col scratch: row K is the constant ones row (makes the
    # bias column of the folded weights ride the MXU accumulation for free);
    # rows K+1..K_pad-1 are zero K-padding.  Written unconditionally every grid
    # step (one aligned (8, L) store) so it is valid on every TensorCore even
    # when the 'parallel' grid axis is sharded across cores.
    row = lax.broadcasted_iota(jnp.int32, (K_pad - K, L), 0)
    patch_ref[K:K_pad, :] = (row == 0).astype(jnp.bfloat16)

    def fill_patch(img):
        # img(i) -> (C, HW) f32 slab for image i of this block.  Each tap is an
        # XLU lane rotation + one dense (C, HW) mask multiply (no sublane
        # broadcasts), packed to bf16 and stored straight into the scratch
        # (no concat / relayout before the MXU sees the operand).
        for i in range(b_blk):
            z = img(i)
            for t, (oy, ox) in enumerate(_TAP_OFFSETS):
                off = oy * W + ox
                if off == 0:
                    tap = z                                        # centre tap: always valid
                else:
                    rolled = pltpu.roll(z, shift=(-off) % HW, axis=1)
                    tap = rolled * mask_ref[t * C:(t + 1) * C, :]  # zero the halo
                patch_ref[t * C:(t + 1) * C, i * HW:(i + 1) * HW] = tap.astype(jnp.bfloat16)

    # ---- conv1 (+ folded BN1 scale/bias) as one K=K_pad MXU matmul, relu ----
    fill_patch(lambda i: x_ref[i])
    acc1 = jnp.dot(w1_ref[...], patch_ref[...], preferred_element_type=jnp.float32)
    y1 = jnp.maximum(acc1, 0.0)                                    # (C, L) f32

    # ---- conv2 (+ folded BN2 scale/bias) ----
    fill_patch(lambda i: y1[:, i * HW:(i + 1) * HW])
    acc2 = jnp.dot(w2_ref[...], patch_ref[...], preferred_element_type=jnp.float32)

    # ---- residual add + relu, aligned lane-dense stores ----
    for i in range(b_blk):
        out_ref[i] = jnp.maximum(acc2[:, i * HW:(i + 1) * HW] + x_ref[i],
                                 0.0).astype(out_ref.dtype)


def _pick_b_blk(N, HW):
    """Images folded into the lane axis per grid step.

    Widen the matmul N-dimension / amortize per-step overhead, but keep >= 2
    grid steps when N >= 2 so v7x's two TensorCores both get work.
    """
    b = max(1, min(N, 1024 // max(HW, 1)))
    if N >= 2:
        b = min(b, N // 2)
    b = max(b, 1)
    while N % b:
        b -= 1
    return b


@jax.jit
def basic_block_pallas(x_nchw, w1, g1, be1, m1, v1, w2, g2, be2, m2, v2, eps=1e-5):
    """x_nchw: (N, C, H, W) f32; conv weights in PyTorch OIHW layout (Cout, Cin, 3, 3)."""
    N, Cin, H, W = x_nchw.shape
    Cout = w1.shape[0]
    assert Cin == Cout, "downsample=None / stride=1 requires in_channel == out_channel"
    C = Cin
    HW = H * W
    K = 9 * C
    K_pad = K + 8                       # +1 bias column, +7 zero padding (aligned K)

    b_blk = _pick_b_blk(N, HW)
    G = N // b_blk

    # NCHW -> (N, C, H*W): merges trailing dims, free (no HBM copy).
    x_flat = x_nchw.reshape(N, C, HW)

    # Fold eval-mode BatchNorm: scale into the conv weights, bias as an extra
    # weight column multiplying the constant ones row of the im2col slab.
    s1 = g1 / jnp.sqrt(v1 + eps)
    s2 = g2 / jnp.sqrt(v2 + eps)
    b1 = be1 - m1 * s1
    b2 = be2 - m2 * s2

    def fold(w, s, b):
        # (Cout, Cin, 3, 3) -> (Cout, 3, 3, Cin) -> (Cout, 9*Cin); column t*Cin+c
        # matches patch row order (t = tap, c = channel).  Append bias column
        # and zero padding to K_pad; bf16 MXU operands.
        wk = jnp.transpose(w, (0, 2, 3, 1)).reshape(C, K) * s[:, None]
        return jnp.concatenate(
            [wk, b[:, None], jnp.zeros((C, K_pad - K - 1), wk.dtype)],
            axis=1).astype(jnp.bfloat16)

    w1_full = fold(w1, s1, b1)
    w2_full = fold(w2, s2, b2)

    # Tap-validity masks pre-broadcast over channels: (9*C, H*W) f32, row t*C+c.
    rows = jnp.arange(H)[:, None]
    cols = jnp.arange(W)[None, :]
    m = []
    for oy, ox in _TAP_OFFSETS:
        valid = ((rows + oy >= 0) & (rows + oy < H) &
                 (cols + ox >= 0) & (cols + ox < W))
        m.append(valid.reshape(HW))
    mask9 = jnp.stack(m)                                           # (9, HW)
    mask = jnp.broadcast_to(mask9[:, None, :], (9, C, HW)).reshape(K, HW)
    mask = mask.astype(jnp.float32)

    full = lambda shape: pl.BlockSpec(shape, lambda g: (0,) * len(shape))

    out_flat = pl.pallas_call(
        functools.partial(_basic_block_kernel, C=C, H=H, W=W,
                          b_blk=b_blk, K_pad=K_pad),
        out_shape=jax.ShapeDtypeStruct((N, C, HW), x_nchw.dtype),
        grid_spec=pltpu.PrefetchScalarGridSpec(
            num_scalar_prefetch=0,
            grid=(G,),
            in_specs=[
                pl.BlockSpec((b_blk, C, HW), lambda g: (g, 0, 0)),   # x (and residual)
                full((K, HW)),                                       # masks (resident)
                full((C, K_pad)),                                    # w1 (resident)
                full((C, K_pad)),                                    # w2 (resident)
            ],
            out_specs=pl.BlockSpec((b_blk, C, HW), lambda g: (g, 0, 0)),
            scratch_shapes=[pltpu.VMEM((K_pad, b_blk * HW), jnp.bfloat16)],
        ),
        compiler_params=pltpu.CompilerParams(
            dimension_semantics=("parallel",),
            vmem_limit_bytes=32 * 1024 * 1024,
        ),
    )(x_flat, mask, w1_full, w2_full)

    # (N, C, H*W) -> NCHW: splits the trailing dim, free.
    return out_flat.reshape(N, C, H, W)


def basic_block_reference(x, w1, g1, be1, m1, v1, w2, g2, be2, m2, v2, eps=1e-5):
    """Pure-JAX NCHW f32 reference mirroring the PyTorch forward (eval-mode BN)."""
    def conv(inp, w):
        return lax.conv_general_dilated(inp, w, window_strides=(1, 1),
                                        padding=((1, 1), (1, 1)),
                                        dimension_numbers=('NCHW', 'OIHW', 'NCHW'))

    def bn(inp, g, b, m, v):
        g, b, m, v = (t.reshape(1, -1, 1, 1) for t in (g, b, m, v))
        return (inp - m) / jnp.sqrt(v + eps) * g + b

    out = jnp.maximum(bn(conv(x, w1), g1, be1, m1, v1), 0.0)
    out = bn(conv(out, w2), g2, be2, m2, v2)
    return jnp.maximum(out + x, 0.0)


if __name__ == "__main__":
    def run_case(N, C, H, W, seed=0):
        key = jax.random.PRNGKey(seed)
        k = jax.random.split(key, 8)
        x = jax.random.normal(k[0], (N, C, H, W), jnp.float32)

        # Conv weights (PyTorch OIHW layout), deterministic init.
        w1 = jax.random.normal(k[1], (C, C, 3, 3), jnp.float32) * 0.1
        w2 = jax.random.normal(k[2], (C, C, 3, 3), jnp.float32) * 0.1

        # BatchNorm params / running stats (deterministic, non-trivial).
        g1 = 1.0 + 0.1 * jax.random.normal(k[3], (C,), jnp.float32)
        be1 = 0.1 * jax.random.normal(k[4], (C,), jnp.float32)
        m1 = 0.05 * jax.random.normal(k[5], (C,), jnp.float32)
        v1 = 1.0 + 0.1 * jnp.abs(jax.random.normal(k[6], (C,), jnp.float32))
        g2 = jnp.ones((C,), jnp.float32) * 0.9
        be2 = jnp.full((C,), 0.05, jnp.float32)
        m2 = jnp.full((C,), 0.02, jnp.float32)
        v2 = jnp.full((C,), 1.1, jnp.float32)

        out = basic_block_pallas(x, w1, g1, be1, m1, v1, w2, g2, be2, m2, v2)
        out = jax.block_until_ready(out)

        ref = basic_block_reference(x, w1, g1, be1, m1, v1, w2, g2, be2, m2, v2)
        assert out.shape == (N, C, H, W)
        max_err = float(jnp.max(jnp.abs(out - ref)))
        # bf16 matmul operands with f32 accumulation: expect ~few e-3 max error.
        assert jnp.allclose(out, ref, atol=2e-2, rtol=1e-2), f"max abs err {max_err}"

    run_case(4, 8, 16, 16)   # b_blk=2: batch folded into lanes, grid=2 ('parallel')
    run_case(2, 8, 16, 16)   # b_blk=1 path
    print("KERNEL_OK")
</pallas_src>

<mosaic_0001>
module attributes {stable_mosaic.version = 11 : i64} {
  func.func @_basic_block_kernel(%arg0: i32, %arg1: memref<2x8x256xf32, #tpu.memory_space<vmem>>, %arg2: memref<72x256xf32, #tpu.memory_space<vmem>>, %arg3: memref<8x80xbf16, #tpu.memory_space<vmem>>, %arg4: memref<8x80xbf16, #tpu.memory_space<vmem>>, %arg5: memref<2x8x256xf32, #tpu.memory_space<vmem>>, %arg6: memref<80x512xbf16, #tpu.memory_space<vmem>>) attributes {dimension_semantics = [#tpu.dimension_semantics<parallel>], iteration_bounds = array<i64: 2>, scalar_prefetch = 0 : i64, scratch_operands = 1 : i64, tpu.core_type = #tpu.core_type<tc>, window_params = [{transform_indices = @transform_0, window_bounds = array<i64: 2, 8, 256>}, {pipeline_mode = #tpu.pipeline_mode<synchronous>, transform_indices = @transform_1, window_bounds = array<i64: 72, 256>}, {pipeline_mode = #tpu.pipeline_mode<synchronous>, transform_indices = @transform_2, window_bounds = array<i64: 8, 80>}, {pipeline_mode = #tpu.pipeline_mode<synchronous>, transform_indices = @transform_3, window_bounds = array<i64: 8, 80>}, {transform_indices = @transform_4, window_bounds = array<i64: 2, 8, 256>}]} {
    %0 = tpu.iota {dimensions = array<i32: 0>} : vector<8x512xi32>
    %c0_i32 = arith.constant 0 : i32
    %1 = vector.broadcast %c0_i32 : i32 to vector<8x512xi32>
    %2 = arith.cmpi eq, %0, %1 : vector<8x512xi32>
    %3 = arith.extui %2 : vector<8x512xi1> to vector<8x512xi32>
    %4 = arith.sitofp %3 : vector<8x512xi32> to vector<8x512xf32>
    %5 = arith.truncf %4 : vector<8x512xf32> to vector<8x512xbf16>
    %c72 = arith.constant 72 : index
    %c0 = arith.constant 0 : index
    %6 = vector.load %arg6[%c72, %c0] : memref<80x512xbf16, #tpu.memory_space<vmem>>, vector<8x512xbf16>
    tpu.vector_store %arg6[%c72, %c0], %5 {strides = array<i32>} : memref<80x512xbf16, #tpu.memory_space<vmem>>, vector<8x512xbf16>,
    %c0_0 = arith.constant 0 : index
    %c0_1 = arith.constant 0 : index
    %c0_2 = arith.constant 0 : index
    %7 = vector.load %arg1[%c0_0, %c0_1, %c0_2] : memref<2x8x256xf32, #tpu.memory_space<vmem>>, vector<1x8x256xf32>
    %8 = vector.shape_cast %7 : vector<1x8x256xf32> to vector<8x256xf32>
    %c17_i32 = arith.constant 17 : i32
    %9 = tpu.dynamic_rotate %8 by %c17_i32 dim 1 : vector<8x256xf32>, i32 -> vector<8x256xf32>
    %c0_3 = arith.constant 0 : index
    %c0_4 = arith.constant 0 : index
    %10 = vector.load %arg2[%c0_3, %c0_4] : memref<72x256xf32, #tpu.memory_space<vmem>>, vector<8x256xf32>
    %11 = arith.mulf %9, %10 : vector<8x256xf32>
    %12 = arith.truncf %11 : vector<8x256xf32> to vector<8x256xbf16>
    %c0_5 = arith.constant 0 : index
    %c0_6 = arith.constant 0 : index
    %13 = vector.load %arg6[%c0_5, %c0_6] : memref<80x512xbf16, #tpu.memory_space<vmem>>, vector<8x256xbf16>
    tpu.vector_store %arg6[%c0_5, %c0_6], %12 {strides = array<i32>} : memref<80x512xbf16, #tpu.memory_space<vmem>>, vector<8x256xbf16>,
    %c16_i32 = arith.constant 16 : i32
    %14 = tpu.dynamic_rotate %8 by %c16_i32 dim 1 : vector<8x256xf32>, i32 -> vector<8x256xf32>
    %c8 = arith.constant 8 : index
    %c0_7 = arith.constant 0 : index
    %15 = vector.load %arg2[%c8, %c0_7] : memref<72x256xf32, #tpu.memory_space<vmem>>, vector<8x256xf32>
    %16 = arith.mulf %14, %15 : vector<8x256xf32>
    %17 = arith.truncf %16 : vector<8x256xf32> to vector<8x256xbf16>
    %c8_8 = arith.constant 8 : index
    %c0_9 = arith.constant 0 : index
    %18 = vector.load %arg6[%c8_8, %c0_9] : memref<80x512xbf16, #tpu.memory_space<vmem>>, vector<8x256xbf16>
    tpu.vector_store %arg6[%c8_8, %c0_9], %17 {strides = array<i32>} : memref<80x512xbf16, #tpu.memory_space<vmem>>, vector<8x256xbf16>,
    %c15_i32 = arith.constant 15 : i32
    %19 = tpu.dynamic_rotate %8 by %c15_i32 dim 1 : vector<8x256xf32>, i32 -> vector<8x256xf32>
    %c16 = arith.constant 16 : index
    %c0_10 = arith.constant 0 : index
    %20 = vector.load %arg2[%c16, %c0_10] : memref<72x256xf32, #tpu.memory_space<vmem>>, vector<8x256xf32>
    %21 = arith.mulf %19, %20 : vector<8x256xf32>
    %22 = arith.truncf %21 : vector<8x256xf32> to vector<8x256xbf16>
    %c16_11 = arith.constant 16 : index
    %c0_12 = arith.constant 0 : index
    %23 = vector.load %arg6[%c16_11, %c0_12] : memref<80x512xbf16, #tpu.memory_space<vmem>>, vector<8x256xbf16>
    tpu.vector_store %arg6[%c16_11, %c0_12], %22 {strides = array<i32>} : memref<80x512xbf16, #tpu.memory_space<vmem>>, vector<8x256xbf16>,
    %c1_i32 = arith.constant 1 : i32
    %24 = tpu.dynamic_rotate %8 by %c1_i32 dim 1 : vector<8x256xf32>, i32 -> vector<8x256xf32>
    %c24 = arith.constant 24 : index
    %c0_13 = arith.constant 0 : index
    %25 = vector.load %arg2[%c24, %c0_13] : memref<72x256xf32, #tpu.memory_space<vmem>>, vector<8x256xf32>
    %26 = arith.mulf %24, %25 : vector<8x256xf32>
    %27 = arith.truncf %26 : vector<8x256xf32> to vector<8x256xbf16>
    %c24_14 = arith.constant 24 : index
    %c0_15 = arith.constant 0 : index
    %28 = vector.load %arg6[%c24_14, %c0_15] : memref<80x512xbf16, #tpu.memory_space<vmem>>, vector<8x256xbf16>
    tpu.vector_store %arg6[%c24_14, %c0_15], %27 {strides = array<i32>} : memref<80x512xbf16, #tpu.memory_space<vmem>>, vector<8x256xbf16>,
    %29 = arith.truncf %8 : vector<8x256xf32> to vector<8x256xbf16>
    %c32 = arith.constant 32 : index
    %c0_16 = arith.constant 0 : index
    %30 = vector.load %arg6[%c32, %c0_16] : memref<80x512xbf16, #tpu.memory_space<vmem>>, vector<8x256xbf16>
    tpu.vector_store %arg6[%c32, %c0_16], %29 {strides = array<i32>} : memref<80x512xbf16, #tpu.memory_space<vmem>>, vector<8x256xbf16>,
    %c255_i32 = arith.constant 255 : i32
    %31 = tpu.dynamic_rotate %8 by %c255_i32 dim 1 : vector<8x256xf32>, i32 -> vector<8x256xf32>
    %c40 = arith.constant 40 : index
    %c0_17 = arith.constant 0 : index
    %32 = vector.load %arg2[%c40, %c0_17] : memref<72x256xf32, #tpu.memory_space<vmem>>, vector<8x256xf32>
    %33 = arith.mulf %31, %32 : vector<8x256xf32>
    %34 = arith.truncf %33 : vector<8x256xf32> to vector<8x256xbf16>
    %c40_18 = arith.constant 40 : index
    %c0_19 = arith.constant 0 : index
    %35 = vector.load %arg6[%c40_18, %c0_19] : memref<80x512xbf16, #tpu.memory_space<vmem>>, vector<8x256xbf16>
    tpu.vector_store %arg6[%c40_18, %c0_19], %34 {strides = array<i32>} : memref<80x512xbf16, #tpu.memory_space<vmem>>, vector<8x256xbf16>,
    %c241_i32 = arith.constant 241 : i32
    %36 = tpu.dynamic_rotate %8 by %c241_i32 dim 1 : vector<8x256xf32>, i32 -> vector<8x256xf32>
    %c48 = arith.constant 48 : index
    %c0_20 = arith.constant 0 : index
    %37 = vector.load %arg2[%c48, %c0_20] : memref<72x256xf32, #tpu.memory_space<vmem>>, vector<8x256xf32>
    %38 = arith.mulf %36, %37 : vector<8x256xf32>
    %39 = arith.truncf %38 : vector<8x256xf32> to vector<8x256xbf16>
    %c48_21 = arith.constant 48 : index
    %c0_22 = arith.constant 0 : index
    %40 = vector.load %arg6[%c48_21, %c0_22] : memref<80x512xbf16, #tpu.memory_space<vmem>>, vector<8x256xbf16>
    tpu.vector_store %arg6[%c48_21, %c0_22], %39 {strides = array<i32>} : memref<80x512xbf16, #tpu.memory_space<vmem>>, vector<8x256xbf16>,
    %c240_i32 = arith.constant 240 : i32
    %41 = tpu.dynamic_rotate %8 by %c240_i32 dim 1 : vector<8x256xf32>, i32 -> vector<8x256xf32>
    %c56 = arith.constant 56 : index
    %c0_23 = arith.constant 0 : index
    %42 = vector.load %arg2[%c56, %c0_23] : memref<72x256xf32, #tpu.memory_space<vmem>>, vector<8x256xf32>
    %43 = arith.mulf %41, %42 : vector<8x256xf32>
    %44 = arith.truncf %43 : vector<8x256xf32> to vector<8x256xbf16>
    %c56_24 = arith.constant 56 : index
    %c0_25 = arith.constant 0 : index
    %45 = vector.load %arg6[%c56_24, %c0_25] : memref<80x512xbf16, #tpu.memory_space<vmem>>, vector<8x256xbf16>
    tpu.vector_store %arg6[%c56_24, %c0_25], %44 {strides = array<i32>} : memref<80x512xbf16, #tpu.memory_space<vmem>>, vector<8x256xbf16>,
    %c239_i32 = arith.constant 239 : i32
    %46 = tpu.dynamic_rotate %8 by %c239_i32 dim 1 : vector<8x256xf32>, i32 -> vector<8x256xf32>
    %c64 = arith.constant 64 : index
    %c0_26 = arith.constant 0 : index
    %47 = vector.load %arg2[%c64, %c0_26] : memref<72x256xf32, #tpu.memory_space<vmem>>, vector<8x256xf32>
    %48 = arith.mulf %46, %47 : vector<8x256xf32>
    %49 = arith.truncf %48 : vector<8x256xf32> to vector<8x256xbf16>
    %c64_27 = arith.constant 64 : index
    %c0_28 = arith.constant 0 : index
    %50 = vector.load %arg6[%c64_27, %c0_28] : memref<80x512xbf16, #tpu.memory_space<vmem>>, vector<8x256xbf16>
    tpu.vector_store %arg6[%c64_27, %c0_28], %49 {strides = array<i32>} : memref<80x512xbf16, #tpu.memory_space<vmem>>, vector<8x256xbf16>,
    %c1 = arith.constant 1 : index
    %c0_29 = arith.constant 0 : index
    %c0_30 = arith.constant 0 : index
    %51 = vector.load %arg1[%c1, %c0_29, %c0_30] : memref<2x8x256xf32, #tpu.memory_space<vmem>>, vector<1x8x256xf32>
    %52 = vector.shape_cast %51 : vector<1x8x256xf32> to vector<8x256xf32>
    %c17_i32_31 = arith.constant 17 : i32
    %53 = tpu.dynamic_rotate %52 by %c17_i32_31 dim 1 : vector<8x256xf32>, i32 -> vector<8x256xf32>
    %c0_32 = arith.constant 0 : index
    %c0_33 = arith.constant 0 : index
    %54 = vector.load %arg2[%c0_32, %c0_33] : memref<72x256xf32, #tpu.memory_space<vmem>>, vector<8x256xf32>
    %55 = arith.mulf %53, %54 : vector<8x256xf32>
    %56 = arith.truncf %55 : vector<8x256xf32> to vector<8x256xbf16>
    %c0_34 = arith.constant 0 : index
    %c256 = arith.constant 256 : index
    %57 = vector.load %arg6[%c0_34, %c256] : memref<80x512xbf16, #tpu.memory_space<vmem>>, vector<8x256xbf16>
    tpu.vector_store %arg6[%c0_34, %c256], %56 {strides = array<i32>} : memref<80x512xbf16, #tpu.memory_space<vmem>>, vector<8x256xbf16>,
    %c16_i32_35 = arith.constant 16 : i32
    %58 = tpu.dynamic_rotate %52 by %c16_i32_35 dim 1 : vector<8x256xf32>, i32 -> vector<8x256xf32>
    %c8_36 = arith.constant 8 : index
    %c0_37 = arith.constant 0 : index
    %59 = vector.load %arg2[%c8_36, %c0_37] : memref<72x256xf32, #tpu.memory_space<vmem>>, vector<8x256xf32>
    %60 = arith.mulf %58, %59 : vector<8x256xf32>
    %61 = arith.truncf %60 : vector<8x256xf32> to vector<8x256xbf16>
    %c8_38 = arith.constant 8 : index
    %c256_39 = arith.constant 256 : index
    %62 = vector.load %arg6[%c8_38, %c256_39] : memref<80x512xbf16, #tpu.memory_space<vmem>>, vector<8x256xbf16>
    tpu.vector_store %arg6[%c8_38, %c256_39], %61 {strides = array<i32>} : memref<80x512xbf16, #tpu.memory_space<vmem>>, vector<8x256xbf16>,
    %c15_i32_40 = arith.constant 15 : i32
    %63 = tpu.dynamic_rotate %52 by %c15_i32_40 dim 1 : vector<8x256xf32>, i32 -> vector<8x256xf32>
    %c16_41 = arith.constant 16 : index
    %c0_42 = arith.constant 0 : index
    %64 = vector.load %arg2[%c16_41, %c0_42] : memref<72x256xf32, #tpu.memory_space<vmem>>, vector<8x256xf32>
    %65 = arith.mulf %63, %64 : vector<8x256xf32>
    %66 = arith.truncf %65 : vector<8x256xf32> to vector<8x256xbf16>
    %c16_43 = arith.constant 16 : index
    %c256_44 = arith.constant 256 : index
    %67 = vector.load %arg6[%c16_43, %c256_44] : memref<80x512xbf16, #tpu.memory_space<vmem>>, vector<8x256xbf16>
    tpu.vector_store %arg6[%c16_43, %c256_44], %66 {strides = array<i32>} : memref<80x512xbf16, #tpu.memory_space<vmem>>, vector<8x256xbf16>,
    %c1_i32_45 = arith.constant 1 : i32
    %68 = tpu.dynamic_rotate %52 by %c1_i32_45 dim 1 : vector<8x256xf32>, i32 -> vector<8x256xf32>
    %c24_46 = arith.constant 24 : index
    %c0_47 = arith.constant 0 : index
    %69 = vector.load %arg2[%c24_46, %c0_47] : memref<72x256xf32, #tpu.memory_space<vmem>>, vector<8x256xf32>
    %70 = arith.mulf %68, %69 : vector<8x256xf32>
    %71 = arith.truncf %70 : vector<8x256xf32> to vector<8x256xbf16>
    %c24_48 = arith.constant 24 : index
    %c256_49 = arith.constant 256 : index
    %72 = vector.load %arg6[%c24_48, %c256_49] : memref<80x512xbf16, #tpu.memory_space<vmem>>, vector<8x256xbf16>
    tpu.vector_store %arg6[%c24_48, %c256_49], %71 {strides = array<i32>} : memref<80x512xbf16, #tpu.memory_space<vmem>>, vector<8x256xbf16>,
    %73 = arith.truncf %52 : vector<8x256xf32> to vector<8x256xbf16>
    %c32_50 = arith.constant 32 : index
    %c256_51 = arith.constant 256 : index
    %74 = vector.load %arg6[%c32_50, %c256_51] : memref<80x512xbf16, #tpu.memory_space<vmem>>, vector<8x256xbf16>
    tpu.vector_store %arg6[%c32_50, %c256_51], %73 {strides = array<i32>} : memref<80x512xbf16, #tpu.memory_space<vmem>>, vector<8x256xbf16>,
    %c255_i32_52 = arith.constant 255 : i32
    %75 = tpu.dynamic_rotate %52 by %c255_i32_52 dim 1 : vector<8x256xf32>, i32 -> vector<8x256xf32>
    %c40_53 = arith.constant 40 : index
    %c0_54 = arith.constant 0 : index
    %76 = vector.load %arg2[%c40_53, %c0_54] : memref<72x256xf32, #tpu.memory_space<vmem>>, vector<8x256xf32>
    %77 = arith.mulf %75, %76 : vector<8x256xf32>
    %78 = arith.truncf %77 : vector<8x256xf32> to vector<8x256xbf16>
    %c40_55 = arith.constant 40 : index
    %c256_56 = arith.constant 256 : index
    %79 = vector.load %arg6[%c40_55, %c256_56] : memref<80x512xbf16, #tpu.memory_space<vmem>>, vector<8x256xbf16>
    tpu.vector_store %arg6[%c40_55, %c256_56], %78 {strides = array<i32>} : memref<80x512xbf16, #tpu.memory_space<vmem>>, vector<8x256xbf16>,
    %c241_i32_57 = arith.constant 241 : i32
    %80 = tpu.dynamic_rotate %52 by %c241_i32_57 dim 1 : vector<8x256xf32>, i32 -> vector<8x256xf32>
    %c48_58 = arith.constant 48 : index
    %c0_59 = arith.constant 0 : index
    %81 = vector.load %arg2[%c48_58, %c0_59] : memref<72x256xf32, #tpu.memory_space<vmem>>, vector<8x256xf32>
    %82 = arith.mulf %80, %81 : vector<8x256xf32>
    %83 = arith.truncf %82 : vector<8x256xf32> to vector<8x256xbf16>
    %c48_60 = arith.constant 48 : index
    %c256_61 = arith.constant 256 : index
    %84 = vector.load %arg6[%c48_60, %c256_61] : memref<80x512xbf16, #tpu.memory_space<vmem>>, vector<8x256xbf16>
    tpu.vector_store %arg6[%c48_60, %c256_61], %83 {strides = array<i32>} : memref<80x512xbf16, #tpu.memory_space<vmem>>, vector<8x256xbf16>,
    %c240_i32_62 = arith.constant 240 : i32
    %85 = tpu.dynamic_rotate %52 by %c240_i32_62 dim 1 : vector<8x256xf32>, i32 -> vector<8x256xf32>
    %c56_63 = arith.constant 56 : index
    %c0_64 = arith.constant 0 : index
    %86 = vector.load %arg2[%c56_63, %c0_64] : memref<72x256xf32, #tpu.memory_space<vmem>>, vector<8x256xf32>
    %87 = arith.mulf %85, %86 : vector<8x256xf32>
    %88 = arith.truncf %87 : vector<8x256xf32> to vector<8x256xbf16>
    %c56_65 = arith.constant 56 : index
    %c256_66 = arith.constant 256 : index
    %89 = vector.load %arg6[%c56_65, %c256_66] : memref<80x512xbf16, #tpu.memory_space<vmem>>, vector<8x256xbf16>
    tpu.vector_store %arg6[%c56_65, %c256_66], %88 {strides = array<i32>} : memref<80x512xbf16, #tpu.memory_space<vmem>>, vector<8x256xbf16>,
    %c239_i32_67 = arith.constant 239 : i32
    %90 = tpu.dynamic_rotate %52 by %c239_i32_67 dim 1 : vector<8x256xf32>, i32 -> vector<8x256xf32>
    %c64_68 = arith.constant 64 : index
    %c0_69 = arith.constant 0 : index
    %91 = vector.load %arg2[%c64_68, %c0_69] : memref<72x256xf32, #tpu.memory_space<vmem>>, vector<8x256xf32>
    %92 = arith.mulf %90, %91 : vector<8x256xf32>
    %93 = arith.truncf %92 : vector<8x256xf32> to vector<8x256xbf16>
    %c64_70 = arith.constant 64 : index
    %c256_71 = arith.constant 256 : index
    %94 = vector.load %arg6[%c64_70, %c256_71] : memref<80x512xbf16, #tpu.memory_space<vmem>>, vector<8x256xbf16>
    tpu.vector_store %arg6[%c64_70, %c256_71], %93 {strides = array<i32>} : memref<80x512xbf16, #tpu.memory_space<vmem>>, vector<8x256xbf16>,
    %c0_72 = arith.constant 0 : index
    %c0_73 = arith.constant 0 : index
    %95 = vector.load %arg3[%c0_72, %c0_73] : memref<8x80xbf16, #tpu.memory_space<vmem>>, vector<8x80xbf16>
    %c0_74 = arith.constant 0 : index
    %c0_75 = arith.constant 0 : index
    %96 = vector.load %arg6[%c0_74, %c0_75] : memref<80x512xbf16, #tpu.memory_space<vmem>>, vector<80x512xbf16>
    %cst = arith.constant dense<0.000000e+00> : vector<8x512xf32>
    %97 = tpu.matmul %95, %96, %cst {dimension_numbers = #tpu.dot_dimension_numbers<[1], [0], [0], [1], [0, 0, 1, 1], [], []>} : vector<8x80xbf16>, vector<80x512xbf16>, vector<8x512xf32> -> vector<8x512xf32>
    %cst_76 = arith.constant 0.000000e+00 : f32
    %98 = vector.broadcast %cst_76 : f32 to vector<8x512xf32>
    %99 = arith.maximumf %97, %98 : vector<8x512xf32>
    %100 = vector.extract_strided_slice %99 {offsets = [0, 0], sizes = [8, 256], strides = [1, 1]} : vector<8x512xf32> to vector<8x256xf32>
    %c17_i32_77 = arith.constant 17 : i32
    %101 = tpu.dynamic_rotate %100 by %c17_i32_77 dim 1 : vector<8x256xf32>, i32 -> vector<8x256xf32>
    %c0_78 = arith.constant 0 : index
    %c0_79 = arith.constant 0 : index
    %102 = vector.load %arg2[%c0_78, %c0_79] : memref<72x256xf32, #tpu.memory_space<vmem>>, vector<8x256xf32>
    %103 = arith.mulf %101, %102 : vector<8x256xf32>
    %104 = arith.truncf %103 : vector<8x256xf32> to vector<8x256xbf16>
    %c0_80 = arith.constant 0 : index
    %c0_81 = arith.constant 0 : index
    %105 = vector.load %arg6[%c0_80, %c0_81] : memref<80x512xbf16, #tpu.memory_space<vmem>>, vector<8x256xbf16>
    tpu.vector_store %arg6[%c0_80, %c0_81], %104 {strides = array<i32>} : memref<80x512xbf16, #tpu.memory_space<vmem>>, vector<8x256xbf16>,
    %c16_i32_82 = arith.constant 16 : i32
    %106 = tpu.dynamic_rotate %100 by %c16_i32_82 dim 1 : vector<8x256xf32>, i32 -> vector<8x256xf32>
    %c8_83 = arith.constant 8 : index
    %c0_84 = arith.constant 0 : index
    %107 = vector.load %arg2[%c8_83, %c0_84] : memref<72x256xf32, #tpu.memory_space<vmem>>, vector<8x256xf32>
    %108 = arith.mulf %106, %107 : vector<8x256xf32>
    %109 = arith.truncf %108 : vector<8x256xf32> to vector<8x256xbf16>
    %c8_85 = arith.constant 8 : index
    %c0_86 = arith.constant 0 : index
    %110 = vector.load %arg6[%c8_85, %c0_86] : memref<80x512xbf16, #tpu.memory_space<vmem>>, vector<8x256xbf16>
    tpu.vector_store %arg6[%c8_85, %c0_86], %109 {strides = array<i32>} : memref<80x512xbf16, #tpu.memory_space<vmem>>, vector<8x256xbf16>,
    %c15_i32_87 = arith.constant 15 : i32
    %111 = tpu.dynamic_rotate %100 by %c15_i32_87 dim 1 : vector<8x256xf32>, i32 -> vector<8x256xf32>
    %c16_88 = arith.constant 16 : index
    %c0_89 = arith.constant 0 : index
    %112 = vector.load %arg2[%c16_88, %c0_89] : memref<72x256xf32, #tpu.memory_space<vmem>>, vector<8x256xf32>
    %113 = arith.mulf %111, %112 : vector<8x256xf32>
    %114 = arith.truncf %113 : vector<8x256xf32> to vector<8x256xbf16>
    %c16_90 = arith.constant 16 : index
    %c0_91 = arith.constant 0 : index
    %115 = vector.load %arg6[%c16_90, %c0_91] : memref<80x512xbf16, #tpu.memory_space<vmem>>, vector<8x256xbf16>
    tpu.vector_store %arg6[%c16_90, %c0_91], %114 {strides = array<i32>} : memref<80x512xbf16, #tpu.memory_space<vmem>>, vector<8x256xbf16>,
    %c1_i32_92 = arith.constant 1 : i32
    %116 = tpu.dynamic_rotate %100 by %c1_i32_92 dim 1 : vector<8x256xf32>, i32 -> vector<8x256xf32>
    %c24_93 = arith.constant 24 : index
    %c0_94 = arith.constant 0 : index
    %117 = vector.load %arg2[%c24_93, %c0_94] : memref<72x256xf32, #tpu.memory_space<vmem>>, vector<8x256xf32>
    %118 = arith.mulf %116, %117 : vector<8x256xf32>
    %119 = arith.truncf %118 : vector<8x256xf32> to vector<8x256xbf16>
    %c24_95 = arith.constant 24 : index
    %c0_96 = arith.constant 0 : index
    %120 = vector.load %arg6[%c24_95, %c0_96] : memref<80x512xbf16, #tpu.memory_space<vmem>>, vector<8x256xbf16>
    tpu.vector_store %arg6[%c24_95, %c0_96], %119 {strides = array<i32>} : memref<80x512xbf16, #tpu.memory_space<vmem>>, vector<8x256xbf16>,
    %121 = arith.truncf %100 : vector<8x256xf32> to vector<8x256xbf16>
    %c32_97 = arith.constant 32 : index
    %c0_98 = arith.constant 0 : index
    %122 = vector.load %arg6[%c32_97, %c0_98] : memref<80x512xbf16, #tpu.memory_space<vmem>>, vector<8x256xbf16>
    tpu.vector_store %arg6[%c32_97, %c0_98], %121 {strides = array<i32>} : memref<80x512xbf16, #tpu.memory_space<vmem>>, vector<8x256xbf16>,
    %c255_i32_99 = arith.constant 255 : i32
    %123 = tpu.dynamic_rotate %100 by %c255_i32_99 dim 1 : vector<8x256xf32>, i32 -> vector<8x256xf32>
    %c40_100 = arith.constant 40 : index
    %c0_101 = arith.constant 0 : index
    %124 = vector.load %arg2[%c40_100, %c0_101] : memref<72x256xf32, #tpu.memory_space<vmem>>, vector<8x256xf32>
    %125 = arith.mulf %123, %124 : vector<8x256xf32>
    %126 = arith.truncf %125 : vector<8x256xf32> to vector<8x256xbf16>
    %c40_102 = arith.constant 40 : index
    %c0_103 = arith.constant 0 : index
    %127 = vector.load %arg6[%c40_102, %c0_103] : memref<80x512xbf16, #tpu.memory_space<vmem>>, vector<8x256xbf16>
    tpu.vector_store %arg6[%c40_102, %c0_103], %126 {strides = array<i32>} : memref<80x512xbf16, #tpu.memory_space<vmem>>, vector<8x256xbf16>,
    %c241_i32_104 = arith.constant 241 : i32
    %128 = tpu.dynamic_rotate %100 by %c241_i32_104 dim 1 : vector<8x256xf32>, i32 -> vector<8x256xf32>
    %c48_105 = arith.constant 48 : index
    %c0_106 = arith.constant 0 : index
    %129 = vector.load %arg2[%c48_105, %c0_106] : memref<72x256xf32, #tpu.memory_space<vmem>>, vector<8x256xf32>
    %130 = arith.mulf %128, %129 : vector<8x256xf32>
    %131 = arith.truncf %130 : vector<8x256xf32> to vector<8x256xbf16>
    %c48_107 = arith.constant 48 : index
    %c0_108 = arith.constant 0 : index
    %132 = vector.load %arg6[%c48_107, %c0_108] : memref<80x512xbf16, #tpu.memory_space<vmem>>, vector<8x256xbf16>
    tpu.vector_store %arg6[%c48_107, %c0_108], %131 {strides = array<i32>} : memref<80x512xbf16, #tpu.memory_space<vmem>>, vector<8x256xbf16>,
    %c240_i32_109 = arith.constant 240 : i32
    %133 = tpu.dynamic_rotate %100 by %c240_i32_109 dim 1 : vector<8x256xf32>, i32 -> vector<8x256xf32>
    %c56_110 = arith.constant 56 : index
    %c0_111 = arith.constant 0 : index
    %134 = vector.load %arg2[%c56_110, %c0_111] : memref<72x256xf32, #tpu.memory_space<vmem>>, vector<8x256xf32>
    %135 = arith.mulf %133, %134 : vector<8x256xf32>
    %136 = arith.truncf %135 : vector<8x256xf32> to vector<8x256xbf16>
    %c56_112 = arith.constant 56 : index
    %c0_113 = arith.constant 0 : index
    %137 = vector.load %arg6[%c56_112, %c0_113] : memref<80x512xbf16, #tpu.memory_space<vmem>>, vector<8x256xbf16>
    tpu.vector_store %arg6[%c56_112, %c0_113], %136 {strides = array<i32>} : memref<80x512xbf16, #tpu.memory_space<vmem>>, vector<8x256xbf16>,
    %c239_i32_114 = arith.constant 239 : i32
    %138 = tpu.dynamic_rotate %100 by %c239_i32_114 dim 1 : vector<8x256xf32>, i32 -> vector<8x256xf32>
    %c64_115 = arith.constant 64 : index
    %c0_116 = arith.constant 0 : index
    %139 = vector.load %arg2[%c64_115, %c0_116] : memref<72x256xf32, #tpu.memory_space<vmem>>, vector<8x256xf32>
    %140 = arith.mulf %138, %139 : vector<8x256xf32>
    %141 = arith.truncf %140 : vector<8x256xf32> to vector<8x256xbf16>
    %c64_117 = arith.constant 64 : index
    %c0_118 = arith.constant 0 : index
    %142 = vector.load %arg6[%c64_117, %c0_118] : memref<80x512xbf16, #tpu.memory_space<vmem>>, vector<8x256xbf16>
    tpu.vector_store %arg6[%c64_117, %c0_118], %141 {strides = array<i32>} : memref<80x512xbf16, #tpu.memory_space<vmem>>, vector<8x256xbf16>,
    %143 = vector.extract_strided_slice %99 {offsets = [0, 256], sizes = [8, 256], strides = [1, 1]} : vector<8x512xf32> to vector<8x256xf32>
    %c17_i32_119 = arith.constant 17 : i32
    %144 = tpu.dynamic_rotate %143 by %c17_i32_119 dim 1 : vector<8x256xf32>, i32 -> vector<8x256xf32>
    %c0_120 = arith.constant 0 : index
    %c0_121 = arith.constant 0 : index
    %145 = vector.load %arg2[%c0_120, %c0_121] : memref<72x256xf32, #tpu.memory_space<vmem>>, vector<8x256xf32>
    %146 = arith.mulf %144, %145 : vector<8x256xf32>
    %147 = arith.truncf %146 : vector<8x256xf32> to vector<8x256xbf16>
    %c0_122 = arith.constant 0 : index
    %c256_123 = arith.constant 256 : index
    %148 = vector.load %arg6[%c0_122, %c256_123] : memref<80x512xbf16, #tpu.memory_space<vmem>>, vector<8x256xbf16>
    tpu.vector_store %arg6[%c0_122, %c256_123], %147 {strides = array<i32>} : memref<80x512xbf16, #tpu.memory_space<vmem>>, vector<8x256xbf16>,
    %c16_i32_124 = arith.constant 16 : i32
    %149 = tpu.dynamic_rotate %143 by %c16_i32_124 dim 1 : vector<8x256xf32>, i32 -> vector<8x256xf32>
    %c8_125 = arith.constant 8 : index
    %c0_126 = arith.constant 0 : index
    %150 = vector.load %arg2[%c8_125, %c0_126] : memref<72x256xf32, #tpu.memory_space<vmem>>, vector<8x256xf32>
    %151 = arith.mulf %149, %150 : vector<8x256xf32>
    %152 = arith.truncf %151 : vector<8x256xf32> to vector<8x256xbf16>
    %c8_127 = arith.constant 8 : index
    %c256_128 = arith.constant 256 : index
    %153 = vector.load %arg6[%c8_127, %c256_128] : memref<80x512xbf16, #tpu.memory_space<vmem>>, vector<8x256xbf16>
    tpu.vector_store %arg6[%c8_127, %c256_128], %152 {strides = array<i32>} : memref<80x512xbf16, #tpu.memory_space<vmem>>, vector<8x256xbf16>,
    %c15_i32_129 = arith.constant 15 : i32
    %154 = tpu.dynamic_rotate %143 by %c15_i32_129 dim 1 : vector<8x256xf32>, i32 -> vector<8x256xf32>
    %c16_130 = arith.constant 16 : index
    %c0_131 = arith.constant 0 : index
    %155 = vector.load %arg2[%c16_130, %c0_131] : memref<72x256xf32, #tpu.memory_space<vmem>>, vector<8x256xf32>
    %156 = arith.mulf %154, %155 : vector<8x256xf32>
    %157 = arith.truncf %156 : vector<8x256xf32> to vector<8x256xbf16>
    %c16_132 = arith.constant 16 : index
    %c256_133 = arith.constant 256 : index
    %158 = vector.load %arg6[%c16_132, %c256_133] : memref<80x512xbf16, #tpu.memory_space<vmem>>, vector<8x256xbf16>
    tpu.vector_store %arg6[%c16_132, %c256_133], %157 {strides = array<i32>} : memref<80x512xbf16, #tpu.memory_space<vmem>>, vector<8x256xbf16>,
    %c1_i32_134 = arith.constant 1 : i32
    %159 = tpu.dynamic_rotate %143 by %c1_i32_134 dim 1 : vector<8x256xf32>, i32 -> vector<8x256xf32>
    %c24_135 = arith.constant 24 : index
    %c0_136 = arith.constant 0 : index
    %160 = vector.load %arg2[%c24_135, %c0_136] : memref<72x256xf32, #tpu.memory_space<vmem>>, vector<8x256xf32>
    %161 = arith.mulf %159, %160 : vector<8x256xf32>
    %162 = arith.truncf %161 : vector<8x256xf32> to vector<8x256xbf16>
    %c24_137 = arith.constant 24 : index
    %c256_138 = arith.constant 256 : index
    %163 = vector.load %arg6[%c24_137, %c256_138] : memref<80x512xbf16, #tpu.memory_space<vmem>>, vector<8x256xbf16>
    tpu.vector_store %arg6[%c24_137, %c256_138], %162 {strides = array<i32>} : memref<80x512xbf16, #tpu.memory_space<vmem>>, vector<8x256xbf16>,
    %164 = arith.truncf %143 : vector<8x256xf32> to vector<8x256xbf16>
    %c32_139 = arith.constant 32 : index
    %c256_140 = arith.constant 256 : index
    %165 = vector.load %arg6[%c32_139, %c256_140] : memref<80x512xbf16, #tpu.memory_space<vmem>>, vector<8x256xbf16>
    tpu.vector_store %arg6[%c32_139, %c256_140], %164 {strides = array<i32>} : memref<80x512xbf16, #tpu.memory_space<vmem>>, vector<8x256xbf16>,
    %c255_i32_141 = arith.constant 255 : i32
    %166 = tpu.dynamic_rotate %143 by %c255_i32_141 dim 1 : vector<8x256xf32>, i32 -> vector<8x256xf32>
    %c40_142 = arith.constant 40 : index
    %c0_143 = arith.constant 0 : index
    %167 = vector.load %arg2[%c40_142, %c0_143] : memref<72x256xf32, #tpu.memory_space<vmem>>, vector<8x256xf32>
    %168 = arith.mulf %166, %167 : vector<8x256xf32>
    %169 = arith.truncf %168 : vector<8x256xf32> to vector<8x256xbf16>
    %c40_144 = arith.constant 40 : index
    %c256_145 = arith.constant 256 : index
    %170 = vector.load %arg6[%c40_144, %c256_145] : memref<80x512xbf16, #tpu.memory_space<vmem>>, vector<8x256xbf16>
    tpu.vector_store %arg6[%c40_144, %c256_145], %169 {strides = array<i32>} : memref<80x512xbf16, #tpu.memory_space<vmem>>, vector<8x256xbf16>,
    %c241_i32_146 = arith.constant 241 : i32
    %171 = tpu.dynamic_rotate %143 by %c241_i32_146 dim 1 : vector<8x256xf32>, i32 -> vector<8x256xf32>
    %c48_147 = arith.constant 48 : index
    %c0_148 = arith.constant 0 : index
    %172 = vector.load %arg2[%c48_147, %c0_148] : memref<72x256xf32, #tpu.memory_space<vmem>>, vector<8x256xf32>
    %173 = arith.mulf %171, %172 : vector<8x256xf32>
    %174 = arith.truncf %173 : vector<8x256xf32> to vector<8x256xbf16>
    %c48_149 = arith.constant 48 : index
    %c256_150 = arith.constant 256 : index
    %175 = vector.load %arg6[%c48_149, %c256_150] : memref<80x512xbf16, #tpu.memory_space<vmem>>, vector<8x256xbf16>
    tpu.vector_store %arg6[%c48_149, %c256_150], %174 {strides = array<i32>} : memref<80x512xbf16, #tpu.memory_space<vmem>>, vector<8x256xbf16>,
    %c240_i32_151 = arith.constant 240 : i32
    %176 = tpu.dynamic_rotate %143 by %c240_i32_151 dim 1 : vector<8x256xf32>, i32 -> vector<8x256xf32>
    %c56_152 = arith.constant 56 : index
    %c0_153 = arith.constant 0 : index
    %177 = vector.load %arg2[%c56_152, %c0_153] : memref<72x256xf32, #tpu.memory_space<vmem>>, vector<8x256xf32>
    %178 = arith.mulf %176, %177 : vector<8x256xf32>
    %179 = arith.truncf %178 : vector<8x256xf32> to vector<8x256xbf16>
    %c56_154 = arith.constant 56 : index
    %c256_155 = arith.constant 256 : index
    %180 = vector.load %arg6[%c56_154, %c256_155] : memref<80x512xbf16, #tpu.memory_space<vmem>>, vector<8x256xbf16>
    tpu.vector_store %arg6[%c56_154, %c256_155], %179 {strides = array<i32>} : memref<80x512xbf16, #tpu.memory_space<vmem>>, vector<8x256xbf16>,
    %c239_i32_156 = arith.constant 239 : i32
    %181 = tpu.dynamic_rotate %143 by %c239_i32_156 dim 1 : vector<8x256xf32>, i32 -> vector<8x256xf32>
    %c64_157 = arith.constant 64 : index
    %c0_158 = arith.constant 0 : index
    %182 = vector.load %arg2[%c64_157, %c0_158] : memref<72x256xf32, #tpu.memory_space<vmem>>, vector<8x256xf32>
    %183 = arith.mulf %181, %182 : vector<8x256xf32>
    %184 = arith.truncf %183 : vector<8x256xf32> to vector<8x256xbf16>
    %c64_159 = arith.constant 64 : index
    %c256_160 = arith.constant 256 : index
    %185 = vector.load %arg6[%c64_159, %c256_160] : memref<80x512xbf16, #tpu.memory_space<vmem>>, vector<8x256xbf16>
    tpu.vector_store %arg6[%c64_159, %c256_160], %184 {strides = array<i32>} : memref<80x512xbf16, #tpu.memory_space<vmem>>, vector<8x256xbf16>,
    %c0_161 = arith.constant 0 : index
    %c0_162 = arith.constant 0 : index
    %186 = vector.load %arg4[%c0_161, %c0_162] : memref<8x80xbf16, #tpu.memory_space<vmem>>, vector<8x80xbf16>
    %c0_163 = arith.constant 0 : index
    %c0_164 = arith.constant 0 : index
    %187 = vector.load %arg6[%c0_163, %c0_164] : memref<80x512xbf16, #tpu.memory_space<vmem>>, vector<80x512xbf16>
    %cst_165 = arith.constant dense<0.000000e+00> : vector<8x512xf32>
    %188 = tpu.matmul %186, %187, %cst_165 {dimension_numbers = #tpu.dot_dimension_numbers<[1], [0], [0], [1], [0, 0, 1, 1], [], []>} : vector<8x80xbf16>, vector<80x512xbf16>, vector<8x512xf32> -> vector<8x512xf32>
    %189 = vector.extract_strided_slice %188 {offsets = [0, 0], sizes = [8, 256], strides = [1, 1]} : vector<8x512xf32> to vector<8x256xf32>
    %c0_166 = arith.constant 0 : index
    %c0_167 = arith.constant 0 : index
    %c0_168 = arith.constant 0 : index
    %190 = vector.load %arg1[%c0_166, %c0_167, %c0_168] : memref<2x8x256xf32, #tpu.memory_space<vmem>>, vector<1x8x256xf32>
    %191 = vector.shape_cast %190 : vector<1x8x256xf32> to vector<8x256xf32>
    %192 = arith.addf %189, %191 : vector<8x256xf32>
    %cst_169 = arith.constant 0.000000e+00 : f32
    %193 = vector.broadcast %cst_169 : f32 to vector<8x256xf32>
    %194 = arith.maximumf %192, %193 : vector<8x256xf32>
    %c0_170 = arith.constant 0 : index
    %c0_171 = arith.constant 0 : index
    %c0_172 = arith.constant 0 : index
    %195 = vector.load %arg5[%c0_170, %c0_171, %c0_172] : memref<2x8x256xf32, #tpu.memory_space<vmem>>, vector<1x8x256xf32>
    %196 = vector.shape_cast %195 : vector<1x8x256xf32> to vector<8x256xf32>
    %197 = vector.shape_cast %194 : vector<8x256xf32> to vector<1x8x256xf32>
    tpu.vector_store %arg5[%c0_170, %c0_171, %c0_172], %197 {strides = array<i32>} : memref<2x8x256xf32, #tpu.memory_space<vmem>>, vector<1x8x256xf32>,
    %198 = vector.extract_strided_slice %188 {offsets = [0, 256], sizes = [8, 256], strides = [1, 1]} : vector<8x512xf32> to vector<8x256xf32>
    %c1_173 = arith.constant 1 : index
    %c0_174 = arith.constant 0 : index
    %c0_175 = arith.constant 0 : index
    %199 = vector.load %arg1[%c1_173, %c0_174, %c0_175] : memref<2x8x256xf32, #tpu.memory_space<vmem>>, vector<1x8x256xf32>
    %200 = vector.shape_cast %199 : vector<1x8x256xf32> to vector<8x256xf32>
    %201 = arith.addf %198, %200 : vector<8x256xf32>
    %cst_176 = arith.constant 0.000000e+00 : f32
    %202 = vector.broadcast %cst_176 : f32 to vector<8x256xf32>
    %203 = arith.maximumf %201, %202 : vector<8x256xf32>
    %c1_177 = arith.constant 1 : index
    %c0_178 = arith.constant 0 : index
    %c0_179 = arith.constant 0 : index
    %204 = vector.load %arg5[%c1_177, %c0_178, %c0_179] : memref<2x8x256xf32, #tpu.memory_space<vmem>>, vector<1x8x256xf32>
    %205 = vector.shape_cast %204 : vector<1x8x256xf32> to vector<8x256xf32>
    %206 = vector.shape_cast %203 : vector<8x256xf32> to vector<1x8x256xf32>
    tpu.vector_store %arg5[%c1_177, %c0_178, %c0_179], %206 {strides = array<i32>} : memref<2x8x256xf32, #tpu.memory_space<vmem>>, vector<1x8x256xf32>,
    return
  }
  func.func @transform_0(%arg0: i32) -> (i32, i32, i32) {
    %c0_i32 = arith.constant 0 : i32
    %c0_i32_0 = arith.constant 0 : i32
    %c0_i32_1 = arith.constant 0 : i32
    return %arg0, %c0_i32, %c0_i32_0 : i32, i32, i32
  }
  func.func @transform_1(%arg0: i32) -> (i32, i32) {
    %c0_i32 = arith.constant 0 : i32
    %c0_i32_0 = arith.constant 0 : i32
    %c0_i32_1 = arith.constant 0 : i32
    return %c0_i32, %c0_i32_0 : i32, i32
  }
  func.func @transform_2(%arg0: i32) -> (i32, i32) {
    %c0_i32 = arith.constant 0 : i32
    %c0_i32_0 = arith.constant 0 : i32
    %c0_i32_1 = arith.constant 0 : i32
    return %c0_i32, %c0_i32_0 : i32, i32
  }
  func.func @transform_3(%arg0: i32) -> (i32, i32) {
    %c0_i32 = arith.constant 0 : i32
    %c0_i32_0 = arith.constant 0 : i32
    %c0_i32_1 = arith.constant 0 : i32
    return %c0_i32, %c0_i32_0 : i32, i32
  }
  func.func @transform_4(%arg0: i32) -> (i32, i32, i32) {
    %c0_i32 = arith.constant 0 : i32
    %c0_i32_0 = arith.constant 0 : i32
    %c0_i32_1 = arith.constant 0 : i32
    return %arg0, %c0_i32, %c0_i32_0 : i32, i32, i32
  }
}

</mosaic_0001>

<llo_original>
// kernel: basic_block_pallas.1
$region0: #{basic_block_pallas.1}
  #allocation0 [shape = 'u32[]', space=smem, size = 0x4, offset = 0x4, fixed_abs, tag = 'smem constant byte address 0x4 - core index']
  #allocation1 [shape = 'u32[144,128]{1,0:T(1,128)}', space=vmem, size = 0x12000, scoped, tag = 'internal scratch']
  #allocation2 [shape = 'bf16[80,512]{1,0:T(16,128)(2,1)}', space=vmem, size = 0x14000, scoped, tag = 'scratch operand']
  %s0 = inlined_call_operand.vmem [shape: f32[4,8,256], index: 0, kind: input, shape index: {}]
  %s1 = inlined_call_operand.vmem [shape: f32[72,256], index: 1, kind: input, shape index: {}]
  %s2 = inlined_call_operand.vmem [shape: bf16[8,80], index: 2, kind: input, shape index: {}]
  %s3 = inlined_call_operand.vmem [shape: bf16[8,80], index: 3, kind: input, shape index: {}]
  %s4 = inlined_call_operand.vmem [shape: f32[4,8,256], index: 4, kind: output, shape index: {}]
  %s5 = sld [smem:[#allocation0]]
  $region49: #{basic_block_pallas.1} parent=0
    _
  %s7 = ssub.s32 1, %s5
  %s8 = scalar_select 0, %s7, %s5
  loop: start=0, step=1, limit=4
  $region2: #{basic_block_pallas.1} parent=0 // loop_pre_header
    _
  $region3: #{basic_block_pallas.1} parent=0 // loop_header
    %s10 = sphi 0, %s14
    %p11 = scmp.ge.s32.totalorder %s10, 4
    %s20 = sphi 0, %s22
    %s23 = sphi 0, %s20
    %s24 = sphi 0, %s23
    %s40 = sphi 0, %s24
    %s44 = sphi 0, %s44
    %s46 = sphi 0, %s44
    %s47 = sphi 0, %s46
    %s61 = sphi 0, %s47
    %s65 = sphi 0, %s65
    %s67 = sphi 0, %s65
    %s68 = sphi 0, %s67
    %s82 = sphi 0, %s68
    %s86 = sphi 0, %s86
    %s88 = sphi 0, %s86
    %s89 = sphi 0, %s88
    %s103 = sphi 0, %s89
    %s109 = sphi 0, %s111
    %s112 = sphi 0, %s109
    %s113 = sphi 0, %s112
    %s129 = sphi 0, %s113
  $region4: #{basic_block_pallas.1} parent=0 // loop_header_branch
    %13 = sbr.rel (%p11) target = $region8
  $region5: #{basic_block_pallas.1} parent=0 // loop_body
    %s15 = ssub.s32 %s10, 1
    %s16 = ssub.s32 %s10, 2
    %s17 = sadd.s32 %s10, 1
    %s18 = ssub.s32 %s10, %s17
    %p19 = scmp.eq.s32.totalorder %s18, 0
    %s21 = sadd.s32 %s20, 1
    %s22 = scalar_select %p19, %s20, %s21
    %p25 = pneg %p19
    %p26 = scmp.eq.s32.totalorder %s10, 1
    %p27 = por %p25, %p26
    %p28 = scmp.ne.s32.totalorder %s20, %s23
    %p29 = scmp.eq.s32.totalorder %s10, 0
    %p30 = por %p28, %p29
    %p31 = scmp.ne.s32.totalorder %s20, %s23
    %p32 = scmp.eq.s32.totalorder %s15, 1
    %p33 = por %p31, %p32
    %p34 = scmp.ne.s32.totalorder %s23, %s24
    %p35 = scmp.eq.s32.totalorder %s15, 0
    %p36 = por %p34, %p35
    %p37 = scmp.ne.s32.totalorder %s23, %s24
    %p38 = scmp.eq.s32.totalorder %s16, 1
    %p39 = por %p37, %p38
    %p41 = scmp.ne.s32.totalorder %s24, %s40
    %p42 = scmp.eq.s32.totalorder %s16, 0
    %p43 = por %p41, %p42
    %s45 = sadd.s32 %s44, 1
    %p48 = scmp.eq.s32.totalorder %s10, 1
    %p49 = scmp.ne.s32.totalorder %s44, %s46
    %p50 = scmp.eq.s32.totalorder %s10, 0
    %p51 = por %p49, %p50
    %p52 = scmp.ne.s32.totalorder %s44, %s46
    %p53 = scmp.eq.s32.totalorder %s15, 1
    %p54 = por %p52, %p53
    %p55 = scmp.ne.s32.totalorder %s46, %s47
    %p56 = scmp.eq.s32.totalorder %s15, 0
    %p57 = por %p55, %p56
    %p58 = scmp.ne.s32.totalorder %s46, %s47
    %p59 = scmp.eq.s32.totalorder %s16, 1
    %p60 = por %p58, %p59
    %p62 = scmp.ne.s32.totalorder %s47, %s61
    %p63 = scmp.eq.s32.totalorder %s16, 0
    %p64 = por %p62, %p63
    %s66 = sadd.s32 %s65, 1
    %p69 = scmp.eq.s32.totalorder %s10, 1
    %p70 = scmp.ne.s32.totalorder %s65, %s67
    %p71 = scmp.eq.s32.totalorder %s10, 0
    %p72 = por %p70, %p71
    %p73 = scmp.ne.s32.totalorder %s65, %s67
    %p74 = scmp.eq.s32.totalorder %s15, 1
    %p75 = por %p73, %p74
    %p76 = scmp.ne.s32.totalorder %s67, %s68
    %p77 = scmp.eq.s32.totalorder %s15, 0
    %p78 = por %p76, %p77
    %p79 = scmp.ne.s32.totalorder %s67, %s68
    %p80 = scmp.eq.s32.totalorder %s16, 1
    %p81 = por %p79, %p80
    %p83 = scmp.ne.s32.totalorder %s68, %s82
    %p84 = scmp.eq.s32.totalorder %s16, 0
    %p85 = por %p83, %p84
    %s87 = sadd.s32 %s86, 1
    %p90 = scmp.eq.s32.totalorder %s10, 1
    %p91 = scmp.ne.s32.totalorder %s86, %s88
    %p92 = scmp.eq.s32.totalorder %s10, 0
    %p93 = por %p91, %p92
    %p94 = scmp.ne.s32.totalorder %s86, %s88
    %p95 = scmp.eq.s32.totalorder %s15, 1
    %p96 = por %p94, %p95
    %p97 = scmp.ne.s32.totalorder %s88, %s89
    %p98 = scmp.eq.s32.totalorder %s15, 0
    %p99 = por %p97, %p98
    %p100 = scmp.ne.s32.totalorder %s88, %s89
    %p101 = scmp.eq.s32.totalorder %s16, 1
    %p102 = por %p100, %p101
    %p104 = scmp.ne.s32.totalorder %s89, %s103
    %p105 = scmp.eq.s32.totalorder %s16, 0
    %p106 = por %p104, %p105
    %s107 = ssub.s32 %s10, %s17
    %p108 = scmp.eq.s32.totalorder %s107, 0
    %s110 = sadd.s32 %s109, 1
    %s111 = scalar_select %p108, %s109, %s110
    %p114 = pneg %p108
    %p115 = scmp.eq.s32.totalorder %s10, 1
    %p116 = por %p114, %p115
    %p117 = scmp.ne.s32.totalorder %s109, %s112
    %p118 = scmp.eq.s32.totalorder %s10, 0
    %p119 = por %p117, %p118
    %p120 = scmp.ne.s32.totalorder %s109, %s112
    %p121 = scmp.eq.s32.totalorder %s15, 1
    %p122 = por %p120, %p121
    %p123 = scmp.ne.s32.totalorder %s112, %s113
    %p124 = scmp.eq.s32.totalorder %s15, 0
    %p125 = por %p123, %p124
    %p126 = scmp.ne.s32.totalorder %s112, %s113
    %p127 = scmp.eq.s32.totalorder %s16, 1
    %p128 = por %p126, %p127
    %p130 = scmp.ne.s32.totalorder %s113, %s129
    %p131 = scmp.eq.s32.totalorder %s16, 0
    %p132 = por %p130, %p131
    %p133 = scmp.le.s32.totalorder 1, %s10
    %p134 = scmp.lt.s32.totalorder %s10, 3
    %p135 = pnand %p133, %p134
    %p136 = pneg %p135
    // Predicated region
    $region9: #{basic_block_pallas.1} parent=5 // pred_check
      _
    $region10: #{basic_block_pallas.1} parent=5 // pred_check_branch
      %138 = sbr.rel (%p135) target = $region12
    $region11: #{basic_block_pallas.1} parent=5 // pred_region
      %s139 = ssub.s32 %s10, 1
      // Predicated region
      $region13: #{basic_block_pallas.1} parent=11 // pred_check
        %p140 = pneg %p57
      $region14: #{basic_block_pallas.1} parent=11 // pred_check_branch
        %142 = sbr.rel (%p140) target = $region16
      $region15: #{basic_block_pallas.1} parent=11 // pred_region
        _
      $region16: #{basic_block_pallas.1} parent=11 // pred_fallthru
        _
      // Predicated region
      $region17: #{basic_block_pallas.1} parent=11 // pred_check
        %p143 = pneg %p78
      $region18: #{basic_block_pallas.1} parent=11 // pred_check_branch
        %145 = sbr.rel (%p143) target = $region20
      $region19: #{basic_block_pallas.1} parent=11 // pred_region
        _
      $region20: #{basic_block_pallas.1} parent=11 // pred_fallthru
        _
      // Predicated region
      $region21: #{basic_block_pallas.1} parent=11 // pred_check
        %p146 = pneg %p99
      $region22: #{basic_block_pallas.1} parent=11 // pred_check_branch
        %148 = sbr.rel (%p146) target = $region24
      $region23: #{basic_block_pallas.1} parent=11 // pred_region
        _
      $region24: #{basic_block_pallas.1} parent=11 // pred_fallthru
        _
    $region12: #{basic_block_pallas.1} parent=5 // pred_fallthru
      _
    %p149 = scmp.lt.s32.totalorder %s10, 2
    // Predicated region
    $region25: #{basic_block_pallas.1} parent=5 // pred_check
      %p150 = pneg %p149
    $region26: #{basic_block_pallas.1} parent=5 // pred_check_branch
      %152 = sbr.rel (%p150) target = $region28
    $region27: #{basic_block_pallas.1} parent=5 // pred_region
      // Predicated region
      $region29: #{basic_block_pallas.1} parent=27 // pred_check
        %p153 = pneg %p30
      $region30: #{basic_block_pallas.1} parent=27 // pred_check_branch
        %155 = sbr.rel (%p153) target = $region32
      $region31: #{basic_block_pallas.1} parent=27 // pred_region
        %s156 = smul.u32 2, %s10
        %p157 = scmp.lt.s32.totalorder %s156, 3
        %s158 = scalar_select %p157, %s156, 3
        %s159 = smul.addr %s158, 2
        %s160 = smul.addr %s159, 8
        %s161 = scalar_lea.vmem %s0, %s160
        %s162 = smul.u32 2, %s10
      $region32: #{basic_block_pallas.1} parent=27 // pred_fallthru
        _
    $region28: #{basic_block_pallas.1} parent=5 // pred_fallthru
      _
    %p163 = scmp.le.s32.totalorder 1, %s10
    %p164 = scmp.lt.s32.totalorder %s10, 3
    %p165 = pnand %p163, %p164
    %p166 = pneg %p165
    // Predicated region
    $region33: #{basic_block_pallas.1} parent=5 // pred_check
      _
    $region34: #{basic_block_pallas.1} parent=5 // pred_check_branch
      %168 = sbr.rel (%p165) target = $region36
    $region35: #{basic_block_pallas.1} parent=5 // pred_region
      %s169 = ssub.s32 %s10, 1
      %s170 = smul.u32 2, %s15
      %p171 = scmp.lt.s32.totalorder %s170, 3
      %s172 = scalar_select %p171, %s170, 3
      %s173 = smul.addr %s172, 2
      %s174 = smul.addr %s173, 8
      %s175 = scalar_lea.vmem %s0, %s174
      %p176 = pneg %p36
      %p177 = pneg %p33
      %p178 = pneg %p57
      %p179 = pneg %p54
      %p180 = pneg %p78
      %p181 = pneg %p75
      %p182 = pneg %p99
      %p183 = pneg %p96
      %p184 = pneg %p125
      %p185 = pneg %p122
      %s186 = smul.u32 2, %s15
      %p187 = scmp.lt.s32.totalorder %s186, 3
      %s188 = scalar_select %p187, %s186, 3
      %s189 = smul.addr %s188, 2
      %s190 = smul.addr %s189, 8
      %s191 = scalar_lea.vmem %s4, %s190
      %s192 = smul.u32 2, %s15
      %p193 = scmp.lt.s32.totalorder %s192, 3
      %s194 = scalar_select %p193, %s192, 3
      %s195 = smul.addr %s194, 2
      %s196 = smul.addr %s195, 8
      %s197 = scalar_lea.vmem %s0, %s196
      %s198 = smul.u32 2, %s15
      %s199 = smul.u32 2, %s15
      %p200 = scmp.lt.s32.totalorder %s199, 3
      %s201 = scalar_select %p200, %s199, 3
      %s202 = smul.addr %s201, 2
      %s203 = smul.addr %s202, 8
      %s204 = scalar_lea.vmem %s4, %s203
      %s205 = smul.u32 2, %s15
      %v207 = vlaneseq
      %v208 = vshrl.u32 %v207, 7
      %vm209 = vcmp.eq.s32.totalorder %v208, 0
      %v210 = vsel %vm209, 1, 0
      %v211 = vcvt.s32.f32 %v210
      %v212 = vpack.c.bf16 %v211, %v211
      %v214 = vrot.slane %v212, 4
      %216 = vst [vmem:[#allocation2 + $0x80] sm:$0xf0] %v214
      %217 = vst [vmem:[#allocation2 + $0x88] sm:$0xf0] %v214
      %218 = vst [vmem:[#allocation2 + $0x90] sm:$0xf0] %v214
      %219 = vst [vmem:[#allocation2 + $0x98] sm:$0xf0] %v214
      %v220 = vld [vmem:[%s197] sm:$0xff]
      %v221 = vld [vmem:[%s197 + $0x8] sm:$0xff]
      %222 = vrot.lane.b32.xlu0 %v220, 17
      %v223 = vpop.permute.xlu0 %222
      %224 = vrot.lane.b32.xlu0 %v221, 17
      %v225 = vpop.permute.xlu0 %224
      %v226 = vlaneseq
      %v227 = vand.u32 %v226, 127
      %vm228 = vcmp.lt.s32.totalorder %v227, 17
      %v229 = vsel %vm228, %v223, %v225
      %v230 = vsel %vm228, %v225, %v223
      %v231 = vld [vmem:[%s1] sm:$0xff]
      %v232 = vld [vmem:[%s1 + $0x8] sm:$0xff]
      %v233 = vmul.f32 %v230, %v231
      %v234 = vmul.f32 %v229, %v232
      %v235 = vpack.c.bf16 %v233, %v233
      %v236 = vpack.c.bf16 %v234, %v234
      %237 = vst [vmem:[#allocation2] sm:$0xf] %v235
      %238 = vst [vmem:[#allocation2 + $0x8] sm:$0xf] %v236
      %239 = vrot.lane.b32.xlu0 %v220, 16
      %v240 = vpop.permute.xlu0 %239
      %241 = vrot.lane.b32.xlu0 %v221, 16
      %v242 = vpop.permute.xlu0 %241
      %vm243 = vcmp.lt.s32.totalorder %v227, 16
      %v244 = vsel %vm243, %v240, %v242
      %v245 = vsel %vm243, %v242, %v240
      %v246 = vld [vmem:[%s1 + $0x10] sm:$0xff]
      %v247 = vld [vmem:[%s1 + $0x18] sm:$0xff]
      %v248 = vmul.f32 %v245, %v246
      %v249 = vmul.f32 %v244, %v247
      %v250 = vpack.c.bf16 %v248, %v248
      %v251 = vpack.c.bf16 %v249, %v249
      %v254 = vrot.slane %v250, 4
      %v255 = vrot.slane %v251, 4
      %258 = vst [vmem:[#allocation2] sm:$0xf0] %v254
      %259 = vst [vmem:[#allocation2 + $0x8] sm:$0xf0] %v255
      %260 = vrot.lane.b32.xlu0 %v220, 15
      %v261 = vpop.permute.xlu0 %260
      %262 = vrot.lane.b32.xlu0 %v221, 15
      %v263 = vpop.permute.xlu0 %262
      %vm264 = vcmp.lt.s32.totalorder %v227, 15
      %v265 = vsel %vm264, %v261, %v263
      %v266 = vsel %vm264, %v263, %v261
      %v267 = vld [vmem:[%s1 + $0x20] sm:$0xff]
      %v268 = vld [vmem:[%s1 + $0x28] sm:$0xff]
      %v269 = vmul.f32 %v266, %v267
      %v270 = vmul.f32 %v265, %v268
      %v271 = vpack.c.bf16 %v269, %v269
      %v272 = vpack.c.bf16 %v270, %v270
      %273 = vst [vmem:[#allocation2 + $0x20] sm:$0xf] %v271
      %274 = vst [vmem:[#allocation2 + $0x28] sm:$0xf] %v272
      %275 = vrot.lane.b32.xlu0 %v220, 1
      %v276 = vpop.permute.xlu0 %275
      %277 = vrot.lane.b32.xlu0 %v221, 1
      %v278 = vpop.permute.xlu0 %277
      %vm279 = vcmp.lt.s32.totalorder %v227, 1
      %v280 = vsel %vm279, %v276, %v278
      %v281 = vsel %vm279, %v278, %v276
      %v282 = vld [vmem:[%s1 + $0x30] sm:$0xff]
      %v283 = vld [vmem:[%s1 + $0x38] sm:$0xff]
      %v284 = vmul.f32 %v281, %v282
      %v285 = vmul.f32 %v280, %v283
      %v286 = vpack.c.bf16 %v284, %v284
      %v287 = vpack.c.bf16 %v285, %v285
      %v290 = vrot.slane %v286, 4
      %v291 = vrot.slane %v287, 4
      %294 = vst [vmem:[#allocation2 + $0x20] sm:$0xf0] %v290
      %295 = vst [vmem:[#allocation2 + $0x28] sm:$0xf0] %v291
      %v296 = vpack.c.bf16 %v220, %v220
      %v297 = vpack.c.bf16 %v221, %v221
      %298 = vst [vmem:[#allocation2 + $0x40] sm:$0xf] %v296
      %299 = vst [vmem:[#allocation2 + $0x48] sm:$0xf] %v297
      %300 = vrot.lane.b32.xlu0 %v220, 127
      %v301 = vpop.permute.xlu0 %300
      %302 = vrot.lane.b32.xlu0 %v221, 127
      %v303 = vpop.permute.xlu0 %302
      %vm304 = vcmp.lt.s32.totalorder %v227, 127
      %v305 = vsel %vm304, %v301, %v303
      %v306 = vsel %vm304, %v303, %v301
      %v307 = vld [vmem:[%s1 + $0x50] sm:$0xff]
      %v308 = vld [vmem:[%s1 + $0x58] sm:$0xff]
      %v309 = vmul.f32 %v305, %v307
      %v310 = vmul.f32 %v306, %v308
      %v311 = vpack.c.bf16 %v309, %v309
      %v312 = vpack.c.bf16 %v310, %v310
      %v315 = vrot.slane %v311, 4
      %v316 = vrot.slane %v312, 4
      %319 = vst [vmem:[#allocation2 + $0x40] sm:$0xf0] %v315
      %320 = vst [vmem:[#allocation2 + $0x48] sm:$0xf0] %v316
      %321 = vrot.lane.b32.xlu0 %v220, 113
      %v322 = vpop.permute.xlu0 %321
      %323 = vrot.lane.b32.xlu0 %v221, 113
      %v324 = vpop.permute.xlu0 %323
      %vm325 = vcmp.lt.s32.totalorder %v227, 113
      %v326 = vsel %vm325, %v322, %v324
      %v327 = vsel %vm325, %v324, %v322
      %v328 = vld [vmem:[%s1 + $0x60] sm:$0xff]
      %v329 = vld [vmem:[%s1 + $0x68] sm:$0xff]
      %v330 = vmul.f32 %v326, %v328
      %v331 = vmul.f32 %v327, %v329
      %v332 = vpack.c.bf16 %v330, %v330
      %v333 = vpack.c.bf16 %v331, %v331
      %334 = vst [vmem:[#allocation2 + $0x60] sm:$0xf] %v332
      %335 = vst [vmem:[#allocation2 + $0x68] sm:$0xf] %v333
      %336 = vrot.lane.b32.xlu0 %v220, 112
      %v337 = vpop.permute.xlu0 %336
      %338 = vrot.lane.b32.xlu0 %v221, 112
      %v339 = vpop.permute.xlu0 %338
      %vm340 = vcmp.lt.s32.totalorder %v227, 112
      %v341 = vsel %vm340, %v337, %v339
      %v342 = vsel %vm340, %v339, %v337
      %v343 = vld [vmem:[%s1 + $0x70] sm:$0xff]
      %v344 = vld [vmem:[%s1 + $0x78] sm:$0xff]
      %v345 = vmul.f32 %v341, %v343
      %v346 = vmul.f32 %v342, %v344
      %v347 = vpack.c.bf16 %v345, %v345
      %v348 = vpack.c.bf16 %v346, %v346
      %v351 = vrot.slane %v347, 4
      %v352 = vrot.slane %v348, 4
      %355 = vst [vmem:[#allocation2 + $0x60] sm:$0xf0] %v351
      %356 = vst [vmem:[#allocation2 + $0x68] sm:$0xf0] %v352
      %357 = vrot.lane.b32.xlu0 %v220, 111
      %v358 = vpop.permute.xlu0 %357
      %359 = vrot.lane.b32.xlu0 %v221, 111
      %v360 = vpop.permute.xlu0 %359
      %vm361 = vcmp.lt.s32.totalorder %v227, 111
      %v362 = vsel %vm361, %v358, %v360
      %v363 = vsel %vm361, %v360, %v358
      %v364 = vld [vmem:[%s1 + $0x80] sm:$0xff]
      %v365 = vld [vmem:[%s1 + $0x88] sm:$0xff]
      %v366 = vmul.f32 %v362, %v364
      %v367 = vmul.f32 %v363, %v365
      %v368 = vpack.c.bf16 %v366, %v366
      %v369 = vpack.c.bf16 %v367, %v367
      %370 = vst [vmem:[#allocation2 + $0x80] sm:$0xf] %v368
      %371 = vst [vmem:[#allocation2 + $0x88] sm:$0xf] %v369
      %s372 = scalar_lea.vmem %s197, 16
      %v373 = vld [vmem:[%s372] sm:$0xff]
      %v374 = vld [vmem:[%s372 + $0x8] sm:$0xff]
      %375 = vrot.lane.b32.xlu0 %v373, 17
      %v376 = vpop.permute.xlu0 %375
      %377 = vrot.lane.b32.xlu0 %v374, 17
      %v378 = vpop.permute.xlu0 %377
      %v379 = vsel %vm228, %v376, %v378
      %v380 = vsel %vm228, %v378, %v376
      %v381 = vld [vmem:[%s1] sm:$0xff]
      %v382 = vld [vmem:[%s1 + $0x8] sm:$0xff]
      %v383 = vmul.f32 %v380, %v381
      %v384 = vmul.f32 %v379, %v382
      %v385 = vpack.c.bf16 %v383, %v383
      %v386 = vpack.c.bf16 %v384, %v384
      %387 = vst [vmem:[#allocation2 + $0x10] sm:$0xf] %v385
      %388 = vst [vmem:[#allocation2 + $0x18] sm:$0xf] %v386
      %389 = vrot.lane.b32.xlu0 %v373, 16
      %v390 = vpop.permute.xlu0 %389
      %391 = vrot.lane.b32.xlu0 %v374, 16
      %v392 = vpop.permute.xlu0 %391
      %v393 = vsel %vm243, %v390, %v392
      %v394 = vsel %vm243, %v392, %v390
      %v395 = vld [vmem:[%s1 + $0x10] sm:$0xff]
      %v396 = vld [vmem:[%s1 + $0x18] sm:$0xff]
      %v397 = vmul.f32 %v394, %v395
      %v398 = vmul.f32 %v393, %v396
      %v399 = vpack.c.bf16 %v397, %v397
      %v400 = vpack.c.bf16 %v398, %v398
      %v403 = vrot.slane %v399, 4
      %v404 = vrot.slane %v400, 4
      %407 = vst [vmem:[#allocation2 + $0x10] sm:$0xf0] %v403
      %408 = vst [vmem:[#allocation2 + $0x18] sm:$0xf0] %v404
      %409 = vrot.lane.b32.xlu0 %v373, 15
      %v410 = vpop.permute.xlu0 %409
      %411 = vrot.lane.b32.xlu0 %v374, 15
      %v412 = vpop.permute.xlu0 %411
      %v413 = vsel %vm264, %v410, %v412
      %v414 = vsel %vm264, %v412, %v410
      %v415 = vld [vmem:[%s1 + $0x20] sm:$0xff]
      %v416 = vld [vmem:[%s1 + $0x28] sm:$0xff]
      %v417 = vmul.f32 %v414, %v415
      %v418 = vmul.f32 %v413, %v416
      %v419 = vpack.c.bf16 %v417, %v417
      %v420 = vpack.c.bf16 %v418, %v418
      %421 = vst [vmem:[#allocation2 + $0x30] sm:$0xf] %v419
      %422 = vst [vmem:[#allocation2 + $0x38] sm:$0xf] %v420
      %423 = vrot.lane.b32.xlu0 %v373, 1
      %v424 = vpop.permute.xlu0 %423
      %425 = vrot.lane.b32.xlu0 %v374, 1
      %v426 = vpop.permute.xlu0 %425
      %v427 = vsel %vm279, %v424, %v426
      %v428 = vsel %vm279, %v426, %v424
      %v429 = vld [vmem:[%s1 + $0x30] sm:$0xff]
      %v430 = vld [vmem:[%s1 + $0x38] sm:$0xff]
      %v431 = vmul.f32 %v428, %v429
      %v432 = vmul.f32 %v427, %v430
      %v433 = vpack.c.bf16 %v431, %v431
      %v434 = vpack.c.bf16 %v432, %v432
      %v437 = vrot.slane %v433, 4
      %v438 = vrot.slane %v434, 4
      %441 = vst [vmem:[#allocation2 + $0x30] sm:$0xf0] %v437
      %442 = vst [vmem:[#allocation2 + $0x38] sm:$0xf0] %v438
      %v443 = vpack.c.bf16 %v373, %v373
      %v444 = vpack.c.bf16 %v374, %v374
      %445 = vst [vmem:[#allocation2 + $0x50] sm:$0xf] %v443
      %446 = vst [vmem:[#allocation2 + $0x58] sm:$0xf] %v444
      %447 = vrot.lane.b32.xlu0 %v373, 127
      %v448 = vpop.permute.xlu0 %447
      %449 = vrot.lane.b32.xlu0 %v374, 127
      %v450 = vpop.permute.xlu0 %449
      %v451 = vsel %vm304, %v448, %v450
      %v452 = vsel %vm304, %v450, %v448
      %v453 = vld [vmem:[%s1 + $0x50] sm:$0xff]
      %v454 = vld [vmem:[%s1 + $0x58] sm:$0xff]
      %v455 = vmul.f32 %v451, %v453
      %v456 = vmul.f32 %v452, %v454
      %v457 = vpack.c.bf16 %v455, %v455
      %v458 = vpack.c.bf16 %v456, %v456
      %v461 = vrot.slane %v457, 4
      %v462 = vrot.slane %v458, 4
      %465 = vst [vmem:[#allocation2 + $0x50] sm:$0xf0] %v461
      %466 = vst [vmem:[#allocation2 + $0x58] sm:$0xf0] %v462
      %467 = vrot.lane.b32.xlu0 %v373, 113
      %v468 = vpop.permute.xlu0 %467
      %469 = vrot.lane.b32.xlu0 %v374, 113
      %v470 = vpop.permute.xlu0 %469
      %v471 = vsel %vm325, %v468, %v470
      %v472 = vsel %vm325, %v470, %v468
      %v473 = vld [vmem:[%s1 + $0x60] sm:$0xff]
      %v474 = vld [vmem:[%s1 + $0x68] sm:$0xff]
      %v475 = vmul.f32 %v471, %v473
      %v476 = vmul.f32 %v472, %v474
      %v477 = vpack.c.bf16 %v475, %v475
      %v478 = vpack.c.bf16 %v476, %v476
      %479 = vst [vmem:[#allocation2 + $0x70] sm:$0xf] %v477
      %480 = vst [vmem:[#allocation2 + $0x78] sm:$0xf] %v478
      %481 = vrot.lane.b32.xlu0 %v373, 112
      %v482 = vpop.permute.xlu0 %481
      %483 = vrot.lane.b32.xlu0 %v374, 112
      %v484 = vpop.permute.xlu0 %483
      %v485 = vsel %vm340, %v482, %v484
      %v486 = vsel %vm340, %v484, %v482
      %v487 = vld [vmem:[%s1 + $0x70] sm:$0xff]
      %v488 = vld [vmem:[%s1 + $0x78] sm:$0xff]
      %v489 = vmul.f32 %v485, %v487
      %v490 = vmul.f32 %v486, %v488
      %v491 = vpack.c.bf16 %v489, %v489
      %v492 = vpack.c.bf16 %v490, %v490
      %v495 = vrot.slane %v491, 4
      %v496 = vrot.slane %v492, 4
      %499 = vst [vmem:[#allocation2 + $0x70] sm:$0xf0] %v495
      %500 = vst [vmem:[#allocation2 + $0x78] sm:$0xf0] %v496
      %501 = vrot.lane.b32.xlu0 %v373, 111
      %v502 = vpop.permute.xlu0 %501
      %503 = vrot.lane.b32.xlu0 %v374, 111
      %v504 = vpop.permute.xlu0 %503
      %v505 = vsel %vm361, %v502, %v504
      %v506 = vsel %vm361, %v504, %v502
      %v507 = vld [vmem:[%s1 + $0x80] sm:$0xff]
      %v508 = vld [vmem:[%s1 + $0x88] sm:$0xff]
      %v509 = vmul.f32 %v505, %v507
      %v510 = vmul.f32 %v506, %v508
      %v511 = vpack.c.bf16 %v509, %v509
      %v512 = vpack.c.bf16 %v510, %v510
      %513 = vst [vmem:[#allocation2 + $0x90] sm:$0xf] %v511
      %514 = vst [vmem:[#allocation2 + $0x98] sm:$0xf] %v512
      %v515 = vld [vmem:[%s2] sm:$0xf]
      %v516 = vld [vmem:[#allocation2] sm:$0xff]
      %v517 = vld [vmem:[#allocation2 + $0x8] sm:$0xff]
      %v518 = vld [vmem:[#allocation2 + $0x10] sm:$0xff]
      %v519 = vld [vmem:[#allocation2 + $0x18] sm:$0xff]
      %v520 = vld [vmem:[#allocation2 + $0x20] sm:$0xff]
      %v521 = vld [vmem:[#allocation2 + $0x28] sm:$0xff]
      %v522 = vld [vmem:[#allocation2 + $0x30] sm:$0xff]
      %v523 = vld [vmem:[#allocation2 + $0x38] sm:$0xff]
      %v524 = vld [vmem:[#allocation2 + $0x40] sm:$0xff]
      %v525 = vld [vmem:[#allocation2 + $0x48] sm:$0xff]
      %v526 = vld [vmem:[#allocation2 + $0x50] sm:$0xff]
      %v527 = vld [vmem:[#allocation2 + $0x58] sm:$0xff]
      %v528 = vld [vmem:[#allocation2 + $0x60] sm:$0xff]
      %v529 = vld [vmem:[#allocation2 + $0x68] sm:$0xff]
      %v530 = vld [vmem:[#allocation2 + $0x70] sm:$0xff]
      %v531 = vld [vmem:[#allocation2 + $0x78] sm:$0xff]
      %v532 = vld [vmem:[#allocation2 + $0x80] sm:$0xff]
      %v533 = vld [vmem:[#allocation2 + $0x88] sm:$0xff]
      %v534 = vld [vmem:[#allocation2 + $0x90] sm:$0xff]
      %v535 = vld [vmem:[#allocation2 + $0x98] sm:$0xff]
      %vm536 = vcmask 654336
      %v538 = vsel %vm536, %v515, 0
      %540 = vmatprep.subr.bf16.mxu0 %v517
      %541 = vmatpush1.bf16.msra.mxu0 %v516
      %542 = vmatprep.subr.bf16.mxu0 %v521
      %543 = vmatpush1.bf16.msra.mxu0 %v520
      %544 = vmatprep.subr.bf16.mxu0 %v525
      %545 = vmatpush1.bf16.msra.mxu0 %v524
      %546 = vmatprep.subr.bf16.mxu0 %v529
      %547 = vmatpush1.bf16.msra.mxu0 %v528
      %548 = vmatprep.subr.bf16.mxu0 %v533
      %549 = vmatpush1.bf16.msra.mxu0 %v532
      %550 = vmatprep.subr.bf16.mxu0 0
      %551 = vmatpush1.bf16.msra.mxu0 0
      %552 = vmatprep.subr.bf16.mxu0 0
      %553 = vmatpush1.bf16.msra.mxu0 0
      %554 = vmatprep.subr.bf16.mxu0 0
      %555 = vmatpush1.bf16.msra.mxu0 0
      %556 = vmatprep.subr.bf16.mxu0 0
      %557 = vmatpush1.bf16.msra.mxu0 0
      %558 = vmatprep.subr.bf16.mxu0 0
      %559 = vmatpush1.bf16.msra.mxu0 0
      %560 = vmatprep.subr.bf16.mxu0 0
      %561 = vmatpush1.bf16.msra.mxu0 0
      %562 = vmatprep.subr.bf16.mxu0 0
      %563 = vmatpush1.bf16.msra.mxu0 0
      %564 = vmatprep.subr.bf16.mxu0 0
      %565 = vmatpush1.bf16.msra.mxu0 0
      %566 = vmatprep.subr.bf16.mxu0 0
      %567 = vmatpush1.bf16.msra.mxu0 0
      %568 = vmatprep.subr.bf16.mxu0 0
      %569 = vmatpush1.bf16.msra.mxu0 0
      %570 = vmatprep.subr.bf16.mxu0 0
      %571 = vmatpush1.bf16.msra.mxu0 0
      %572 = vmatprep.mubr.bf16.mxu0 0
      %573 = vmatmul.mubr.bf16.gmra.mrb[0].mxu0 %v538
      %v574 = vpop.f32.mrb[0].mxu0
      %v575 = vadd.f32 0.0, %v574
      %v576 = vpop.f32.mrb[0].mxu0
      %v577 = vadd.f32 0.0, %v576
      %v578 = vpop.f32.mrb[0].mxu0
      %v579 = vpop.f32.mrb[0].mxu0
      %580 = vdwg.mxu0
      %581 = vmatprep.subr.bf16.mxu0 %v519
      %582 = vmatpush1.bf16.msra.mxu0 %v518
      %583 = vmatprep.subr.bf16.mxu0 %v523
      %584 = vmatpush1.bf16.msra.mxu0 %v522
      %585 = vmatprep.subr.bf16.mxu0 %v527
      %586 = vmatpush1.bf16.msra.mxu0 %v526
      %587 = vmatprep.subr.bf16.mxu0 %v531
      %588 = vmatpush1.bf16.msra.mxu0 %v530
      %589 = vmatprep.subr.bf16.mxu0 %v535
      %590 = vmatpush1.bf16.msra.mxu0 %v534
      %591 = vmatprep.subr.bf16.mxu0 0
      %592 = vmatpush1.bf16.msra.mxu0 0
      %593 = vmatprep.subr.bf16.mxu0 0
      %594 = vmatpush1.bf16.msra.mxu0 0
      %595 = vmatprep.subr.bf16.mxu0 0
      %596 = vmatpush1.bf16.msra.mxu0 0
      %597 = vmatprep.subr.bf16.mxu0 0
      %598 = vmatpush1.bf16.msra.mxu0 0
      %599 = vmatprep.subr.bf16.mxu0 0
      %600 = vmatpush1.bf16.msra.mxu0 0
      %601 = vmatprep.subr.bf16.mxu0 0
      %602 = vmatpush1.bf16.msra.mxu0 0
      %603 = vmatprep.subr.bf16.mxu0 0
      %604 = vmatpush1.bf16.msra.mxu0 0
      %605 = vmatprep.subr.bf16.mxu0 0
      %606 = vmatpush1.bf16.msra.mxu0 0
      %607 = vmatprep.subr.bf16.mxu0 0
      %608 = vmatpush1.bf16.msra.mxu0 0
      %609 = vmatprep.subr.bf16.mxu0 0
      %610 = vmatpush1.bf16.msra.mxu0 0
      %611 = vmatprep.subr.bf16.mxu0 0
      %612 = vmatpush1.bf16.msra.mxu0 0
      %613 = vmatprep.mubr.bf16.mxu0 0
      %614 = vmatmul.mubr.bf16.gmra.mrb[0].mxu0 %v538
      %v615 = vpop.f32.mrb[0].mxu0
      %v616 = vadd.f32 0.0, %v615
      %v617 = vpop.f32.mrb[0].mxu0
      %v618 = vadd.f32 0.0, %v617
      %v619 = vpop.f32.mrb[0].mxu0
      %v620 = vpop.f32.mrb[0].mxu0
      %621 = vdwg.mxu0
      %v622 = vmax.f32 %v575, 0.0
      %v623 = vmax.f32 %v577, 0.0
      %v624 = vmax.f32 %v616, 0.0
      %v625 = vmax.f32 %v618, 0.0
      %626 = vrot.lane.b32.xlu0 %v622, 17
      %v627 = vpop.permute.xlu0 %626
      %628 = vrot.lane.b32.xlu0 %v623, 17
      %v629 = vpop.permute.xlu0 %628
      %v630 = vsel %vm228, %v627, %v629
      %v631 = vsel %vm228, %v629, %v627
      %v632 = vld [vmem:[%s1] sm:$0xff]
      %v633 = vld [vmem:[%s1 + $0x8] sm:$0xff]
      %v634 = vmul.f32 %v631, %v632
      %v635 = vmul.f32 %v630, %v633
      %v636 = vpack.c.bf16 %v634, %v634
      %v637 = vpack.c.bf16 %v635, %v635
      %638 = vst [vmem:[#allocation2] sm:$0xf] %v636
      %639 = vst [vmem:[#allocation2 + $0x8] sm:$0xf] %v637
      %640 = vrot.lane.b32.xlu0 %v622, 16
      %v641 = vpop.permute.xlu0 %640
      %642 = vrot.lane.b32.xlu0 %v623, 16
      %v643 = vpop.permute.xlu0 %642
      %v644 = vsel %vm243, %v641, %v643
      %v645 = vsel %vm243, %v643, %v641
      %v646 = vld [vmem:[%s1 + $0x10] sm:$0xff]
      %v647 = vld [vmem:[%s1 + $0x18] sm:$0xff]
      %v648 = vmul.f32 %v645, %v646
      %v649 = vmul.f32 %v644, %v647
      %v650 = vpack.c.bf16 %v648, %v648
      %v651 = vpack.c.bf16 %v649, %v649
      %v654 = vrot.slane %v650, 4
      %v655 = vrot.slane %v651, 4
      %658 = vst [vmem:[#allocation2] sm:$0xf0] %v654
      %659 = vst [vmem:[#allocation2 + $0x8] sm:$0xf0] %v655
      %660 = vrot.lane.b32.xlu0 %v622, 15
      %v661 = vpop.permute.xlu0 %660
      %662 = vrot.lane.b32.xlu0 %v623, 15
      %v663 = vpop.permute.xlu0 %662
      %v664 = vsel %vm264, %v661, %v663
      %v665 = vsel %vm264, %v663, %v661
      %v666 = vld [vmem:[%s1 + $0x20] sm:$0xff]
      %v667 = vld [vmem:[%s1 + $0x28] sm:$0xff]
      %v668 = vmul.f32 %v665, %v666
      %v669 = vmul.f32 %v664, %v667
      %v670 = vpack.c.bf16 %v668, %v668
      %v671 = vpack.c.bf16 %v669, %v669
      %672 = vst [vmem:[#allocation2 + $0x20] sm:$0xf] %v670
      %673 = vst [vmem:[#allocation2 + $0x28] sm:$0xf] %v671
      %674 = vrot.lane.b32.xlu0 %v622, 1
      %v675 = vpop.permute.xlu0 %674
      %676 = vrot.lane.b32.xlu0 %v623, 1
      %v677 = vpop.permute.xlu0 %676
      %v678 = vsel %vm279, %v675, %v677
      %v679 = vsel %vm279, %v677, %v675
      %v680 = vld [vmem:[%s1 + $0x30] sm:$0xff]
      %v681 = vld [vmem:[%s1 + $0x38] sm:$0xff]
      %v682 = vmul.f32 %v679, %v680
      %v683 = vmul.f32 %v678, %v681
      %v684 = vpack.c.bf16 %v682, %v682
      %v685 = vpack.c.bf16 %v683, %v683
      %v688 = vrot.slane %v684, 4
      %v689 = vrot.slane %v685, 4
      %692 = vst [vmem:[#allocation2 + $0x20] sm:$0xf0] %v688
      %693 = vst [vmem:[#allocation2 + $0x28] sm:$0xf0] %v689
      %v694 = vpack.c.bf16 %v622, %v622
      %v695 = vpack.c.bf16 %v623, %v623
      %696 = vst [vmem:[#allocation2 + $0x40] sm:$0xf] %v694
      %697 = vst [vmem:[#allocation2 + $0x48] sm:$0xf] %v695
      %698 = vrot.lane.b32.xlu0 %v622, 127
      %v699 = vpop.permute.xlu0 %698
      %700 = vrot.lane.b32.xlu0 %v623, 127
      %v701 = vpop.permute.xlu0 %700
      %v702 = vsel %vm304, %v699, %v701
      %v703 = vsel %vm304, %v701, %v699
      %v704 = vld [vmem:[%s1 + $0x50] sm:$0xff]
      %v705 = vld [vmem:[%s1 + $0x58] sm:$0xff]
      %v706 = vmul.f32 %v702, %v704
      %v707 = vmul.f32 %v703, %v705
      %v708 = vpack.c.bf16 %v706, %v706
      %v709 = vpack.c.bf16 %v707, %v707
      %v712 = vrot.slane %v708, 4
      %v713 = vrot.slane %v709, 4
      %716 = vst [vmem:[#allocation2 + $0x40] sm:$0xf0] %v712
      %717 = vst [vmem:[#allocation2 + $0x48] sm:$0xf0] %v713
      %718 = vrot.lane.b32.xlu0 %v622, 113
      %v719 = vpop.permute.xlu0 %718
      %720 = vrot.lane.b32.xlu0 %v623, 113
      %v721 = vpop.permute.xlu0 %720
      %v722 = vsel %vm325, %v719, %v721
      %v723 = vsel %vm325, %v721, %v719
      %v724 = vld [vmem:[%s1 + $0x60] sm:$0xff]
      %v725 = vld [vmem:[%s1 + $0x68] sm:$0xff]
      %v726 = vmul.f32 %v722, %v724
      %v727 = vmul.f32 %v723, %v725
      %v728 = vpack.c.bf16 %v726, %v726
      %v729 = vpack.c.bf16 %v727, %v727
      %730 = vst [vmem:[#allocation2 + $0x60] sm:$0xf] %v728
      %731 = vst [vmem:[#allocation2 + $0x68] sm:$0xf] %v729
      %732 = vrot.lane.b32.xlu0 %v622, 112
      %v733 = vpop.permute.xlu0 %732
      %734 = vrot.lane.b32.xlu0 %v623, 112
      %v735 = vpop.permute.xlu0 %734
      %v736 = vsel %vm340, %v733, %v735
      %v737 = vsel %vm340, %v735, %v733
      %v738 = vld [vmem:[%s1 + $0x70] sm:$0xff]
      %v739 = vld [vmem:[%s1 + $0x78] sm:$0xff]
      %v740 = vmul.f32 %v736, %v738
      %v741 = vmul.f32 %v737, %v739
      %v742 = vpack.c.bf16 %v740, %v740
      %v743 = vpack.c.bf16 %v741, %v741
      %v746 = vrot.slane %v742, 4
      %v747 = vrot.slane %v743, 4
      %750 = vst [vmem:[#allocation2 + $0x60] sm:$0xf0] %v746
      %751 = vst [vmem:[#allocation2 + $0x68] sm:$0xf0] %v747
      %752 = vrot.lane.b32.xlu0 %v622, 111
      %v753 = vpop.permute.xlu0 %752
      %754 = vrot.lane.b32.xlu0 %v623, 111
      %v755 = vpop.permute.xlu0 %754
      %v756 = vsel %vm361, %v753, %v755
      %v757 = vsel %vm361, %v755, %v753
      %v758 = vld [vmem:[%s1 + $0x80] sm:$0xff]
      %v759 = vld [vmem:[%s1 + $0x88] sm:$0xff]
      %v760 = vmul.f32 %v756, %v758
      %v761 = vmul.f32 %v757, %v759
      %v762 = vpack.c.bf16 %v760, %v760
      %v763 = vpack.c.bf16 %v761, %v761
      %764 = vst [vmem:[#allocation2 + $0x80] sm:$0xf] %v762
      %765 = vst [vmem:[#allocation2 + $0x88] sm:$0xf] %v763
      %766 = vrot.lane.b32.xlu0 %v624, 17
      %v767 = vpop.permute.xlu0 %766
      %768 = vrot.lane.b32.xlu0 %v625, 17
      %v769 = vpop.permute.xlu0 %768
      %v770 = vsel %vm228, %v767, %v769
      %v771 = vsel %vm228, %v769, %v767
      %v772 = vld [vmem:[%s1] sm:$0xff]
      %v773 = vld [vmem:[%s1 + $0x8] sm:$0xff]
      %v774 = vmul.f32 %v771, %v772
      %v775 = vmul.f32 %v770, %v773
      %v776 = vpack.c.bf16 %v774, %v774
      %v777 = vpack.c.bf16 %v775, %v775
      %778 = vst [vmem:[#allocation2 + $0x10] sm:$0xf] %v776
      %779 = vst [vmem:[#allocation2 + $0x18] sm:$0xf] %v777
      %780 = vrot.lane.b32.xlu0 %v624, 16
      %v781 = vpop.permute.xlu0 %780
      %782 = vrot.lane.b32.xlu0 %v625, 16
      %v783 = vpop.permute.xlu0 %782
      %v784 = vsel %vm243, %v781, %v783
      %v785 = vsel %vm243, %v783, %v781
      %v786 = vld [vmem:[%s1 + $0x10] sm:$0xff]
      %v787 = vld [vmem:[%s1 + $0x18] sm:$0xff]
      %v788 = vmul.f32 %v785, %v786
      %v789 = vmul.f32 %v784, %v787
      %v790 = vpack.c.bf16 %v788, %v788
      %v791 = vpack.c.bf16 %v789, %v789
      %v794 = vrot.slane %v790, 4
      %v795 = vrot.slane %v791, 4
      %798 = vst [vmem:[#allocation2 + $0x10] sm:$0xf0] %v794
      %799 = vst [vmem:[#allocation2 + $0x18] sm:$0xf0] %v795
      %800 = vrot.lane.b32.xlu0 %v624, 15
      %v801 = vpop.permute.xlu0 %800
      %802 = vrot.lane.b32.xlu0 %v625, 15
      %v803 = vpop.permute.xlu0 %802
      %v804 = vsel %vm264, %v801, %v803
      %v805 = vsel %vm264, %v803, %v801
      %v806 = vld [vmem:[%s1 + $0x20] sm:$0xff]
      %v807 = vld [vmem:[%s1 + $0x28] sm:$0xff]
      %v808 = vmul.f32 %v805, %v806
      %v809 = vmul.f32 %v804, %v807
      %v810 = vpack.c.bf16 %v808, %v808
      %v811 = vpack.c.bf16 %v809, %v809
      %812 = vst [vmem:[#allocation2 + $0x30] sm:$0xf] %v810
      %813 = vst [vmem:[#allocation2 + $0x38] sm:$0xf] %v811
      %814 = vrot.lane.b32.xlu0 %v624, 1
      %v815 = vpop.permute.xlu0 %814
      %816 = vrot.lane.b32.xlu0 %v625, 1
      %v817 = vpop.permute.xlu0 %816
      %v818 = vsel %vm279, %v815, %v817
      %v819 = vsel %vm279, %v817, %v815
      %v820 = vld [vmem:[%s1 + $0x30] sm:$0xff]
      %v821 = vld [vmem:[%s1 + $0x38] sm:$0xff]
      %v822 = vmul.f32 %v819, %v820
      %v823 = vmul.f32 %v818, %v821
      %v824 = vpack.c.bf16 %v822, %v822
      %v825 = vpack.c.bf16 %v823, %v823
      %v828 = vrot.slane %v824, 4
      %v829 = vrot.slane %v825, 4
      %832 = vst [vmem:[#allocation2 + $0x30] sm:$0xf0] %v828
      %833 = vst [vmem:[#allocation2 + $0x38] sm:$0xf0] %v829
      %v834 = vpack.c.bf16 %v624, %v624
      %v835 = vpack.c.bf16 %v625, %v625
      %836 = vst [vmem:[#allocation2 + $0x50] sm:$0xf] %v834
      %837 = vst [vmem:[#allocation2 + $0x58] sm:$0xf] %v835
      %838 = vrot.lane.b32.xlu0 %v624, 127
      %v839 = vpop.permute.xlu0 %838
      %840 = vrot.lane.b32.xlu0 %v625, 127
      %v841 = vpop.permute.xlu0 %840
      %v842 = vsel %vm304, %v839, %v841
      %v843 = vsel %vm304, %v841, %v839
      %v844 = vld [vmem:[%s1 + $0x50] sm:$0xff]
      %v845 = vld [vmem:[%s1 + $0x58] sm:$0xff]
      %v846 = vmul.f32 %v842, %v844
      %v847 = vmul.f32 %v843, %v845
      %v848 = vpack.c.bf16 %v846, %v846
      %v849 = vpack.c.bf16 %v847, %v847
      %v852 = vrot.slane %v848, 4
      %v853 = vrot.slane %v849, 4
      %856 = vst [vmem:[#allocation2 + $0x50] sm:$0xf0] %v852
      %857 = vst [vmem:[#allocation2 + $0x58] sm:$0xf0] %v853
      %858 = vrot.lane.b32.xlu0 %v624, 113
      %v859 = vpop.permute.xlu0 %858
      %860 = vrot.lane.b32.xlu0 %v625, 113
      %v861 = vpop.permute.xlu0 %860
      %v862 = vsel %vm325, %v859, %v861
      %v863 = vsel %vm325, %v861, %v859
      %v864 = vld [vmem:[%s1 + $0x60] sm:$0xff]
      %v865 = vld [vmem:[%s1 + $0x68] sm:$0xff]
      %v866 = vmul.f32 %v862, %v864
      %v867 = vmul.f32 %v863, %v865
      %v868 = vpack.c.bf16 %v866, %v866
      %v869 = vpack.c.bf16 %v867, %v867
      %870 = vst [vmem:[#allocation2 + $0x70] sm:$0xf] %v868
      %871 = vst [vmem:[#allocation2 + $0x78] sm:$0xf] %v869
      %872 = vrot.lane.b32.xlu0 %v624, 112
      %v873 = vpop.permute.xlu0 %872
      %874 = vrot.lane.b32.xlu0 %v625, 112
      %v875 = vpop.permute.xlu0 %874
      %v876 = vsel %vm340, %v873, %v875
      %v877 = vsel %vm340, %v875, %v873
      %v878 = vld [vmem:[%s1 + $0x70] sm:$0xff]
      %v879 = vld [vmem:[%s1 + $0x78] sm:$0xff]
      %v880 = vmul.f32 %v876, %v878
      %v881 = vmul.f32 %v877, %v879
      %v882 = vpack.c.bf16 %v880, %v880
      %v883 = vpack.c.bf16 %v881, %v881
      %v886 = vrot.slane %v882, 4
      %v887 = vrot.slane %v883, 4
      %890 = vst [vmem:[#allocation2 + $0x70] sm:$0xf0] %v886
      %891 = vst [vmem:[#allocation2 + $0x78] sm:$0xf0] %v887
      %892 = vrot.lane.b32.xlu0 %v624, 111
      %v893 = vpop.permute.xlu0 %892
      %894 = vrot.lane.b32.xlu0 %v625, 111
      %v895 = vpop.permute.xlu0 %894
      %v896 = vsel %vm361, %v893, %v895
      %v897 = vsel %vm361, %v895, %v893
      %v898 = vld [vmem:[%s1 + $0x80] sm:$0xff]
      %v899 = vld [vmem:[%s1 + $0x88] sm:$0xff]
      %v900 = vmul.f32 %v896, %v898
      %v901 = vmul.f32 %v897, %v899
      %v902 = vpack.c.bf16 %v900, %v900
      %v903 = vpack.c.bf16 %v901, %v901
      %904 = vst [vmem:[#allocation2 + $0x90] sm:$0xf] %v902
      %905 = vst [vmem:[#allocation2 + $0x98] sm:$0xf] %v903
      %v906 = vld [vmem:[%s3] sm:$0xf]
      %v907 = vld [vmem:[#allocation2] sm:$0xff]
      %v908 = vld [vmem:[#allocation2 + $0x8] sm:$0xff]
      %v909 = vld [vmem:[#allocation2 + $0x10] sm:$0xff]
      %v910 = vld [vmem:[#allocation2 + $0x18] sm:$0xff]
      %v911 = vld [vmem:[#allocation2 + $0x20] sm:$0xff]
      %v912 = vld [vmem:[#allocation2 + $0x28] sm:$0xff]
      %v913 = vld [vmem:[#allocation2 + $0x30] sm:$0xff]
      %v914 = vld [vmem:[#allocation2 + $0x38] sm:$0xff]
      %v915 = vld [vmem:[#allocation2 + $0x40] sm:$0xff]
      %v916 = vld [vmem:[#allocation2 + $0x48] sm:$0xff]
      %v917 = vld [vmem:[#allocation2 + $0x50] sm:$0xff]
      %v918 = vld [vmem:[#allocation2 + $0x58] sm:$0xff]
      %v919 = vld [vmem:[#allocation2 + $0x60] sm:$0xff]
      %v920 = vld [vmem:[#allocation2 + $0x68] sm:$0xff]
      %v921 = vld [vmem:[#allocation2 + $0x70] sm:$0xff]
      %v922 = vld [vmem:[#allocation2 + $0x78] sm:$0xff]
      %v923 = vld [vmem:[#allocation2 + $0x80] sm:$0xff]
      %v924 = vld [vmem:[#allocation2 + $0x88] sm:$0xff]
      %v925 = vld [vmem:[#allocation2 + $0x90] sm:$0xff]
      %v926 = vld [vmem:[#allocation2 + $0x98] sm:$0xff]
      %v928 = vsel %vm536, %v906, 0
      %930 = vmatprep.subr.bf16.mxu0 %v908
      %931 = vmatpush1.bf16.msra.mxu0 %v907
      %932 = vmatprep.subr.bf16.mxu0 %v912
      %933 = vmatpush1.bf16.msra.mxu0 %v911
      %934 = vmatprep.subr.bf16.mxu0 %v916
      %935 = vmatpush1.bf16.msra.mxu0 %v915
      %936 = vmatprep.subr.bf16.mxu0 %v920
      %937 = vmatpush1.bf16.msra.mxu0 %v919
      %938 = vmatprep.subr.bf16.mxu0 %v924
      %939 = vmatpush1.bf16.msra.mxu0 %v923
      %940 = vmatprep.subr.bf16.mxu0 0
      %941 = vmatpush1.bf16.msra.mxu0 0
      %942 = vmatprep.subr.bf16.mxu0 0
      %943 = vmatpush1.bf16.msra.mxu0 0
      %944 = vmatprep.subr.bf16.mxu0 0
      %945 = vmatpush1.bf16.msra.mxu0 0
      %946 = vmatprep.subr.bf16.mxu0 0
      %947 = vmatpush1.bf16.msra.mxu0 0
      %948 = vmatprep.subr.bf16.mxu0 0
      %949 = vmatpush1.bf16.msra.mxu0 0
      %950 = vmatprep.subr.bf16.mxu0 0
      %951 = vmatpush1.bf16.msra.mxu0 0
      %952 = vmatprep.subr.bf16.mxu0 0
      %953 = vmatpush1.bf16.msra.mxu0 0
      %954 = vmatprep.subr.bf16.mxu0 0
      %955 = vmatpush1.bf16.msra.mxu0 0
      %956 = vmatprep.subr.bf16.mxu0 0
      %957 = vmatpush1.bf16.msra.mxu0 0
      %958 = vmatprep.subr.bf16.mxu0 0
      %959 = vmatpush1.bf16.msra.mxu0 0
      %960 = vmatprep.subr.bf16.mxu0 0
      %961 = vmatpush1.bf16.msra.mxu0 0
      %962 = vmatprep.mubr.bf16.mxu0 0
      %963 = vmatmul.mubr.bf16.gmra.mrb[0].mxu0 %v928
      %v964 = vpop.f32.mrb[0].mxu0
      %v965 = vadd.f32 0.0, %v964
      %v966 = vpop.f32.mrb[0].mxu0
      %v967 = vadd.f32 0.0, %v966
      %v968 = vpop.f32.mrb[0].mxu0
      %v969 = vpop.f32.mrb[0].mxu0
      %970 = vdwg.mxu0
      %971 = vmatprep.subr.bf16.mxu0 %v910
      %972 = vmatpush1.bf16.msra.mxu0 %v909
      %973 = vmatprep.subr.bf16.mxu0 %v914
      %974 = vmatpush1.bf16.msra.mxu0 %v913
      %975 = vmatprep.subr.bf16.mxu0 %v918
      %976 = vmatpush1.bf16.msra.mxu0 %v917
      %977 = vmatprep.subr.bf16.mxu0 %v922
      %978 = vmatpush1.bf16.msra.mxu0 %v921
      %979 = vmatprep.subr.bf16.mxu0 %v926
      %980 = vmatpush1.bf16.msra.mxu0 %v925
      %981 = vmatprep.subr.bf16.mxu0 0
      %982 = vmatpush1.bf16.msra.mxu0 0
      %983 = vmatprep.subr.bf16.mxu0 0
      %984 = vmatpush1.bf16.msra.mxu0 0
      %985 = vmatprep.subr.bf16.mxu0 0
      %986 = vmatpush1.bf16.msra.mxu0 0
      %987 = vmatprep.subr.bf16.mxu0 0
      %988 = vmatpush1.bf16.msra.mxu0 0
      %989 = vmatprep.subr.bf16.mxu0 0
      %990 = vmatpush1.bf16.msra.mxu0 0
      %991 = vmatprep.subr.bf16.mxu0 0
      %992 = vmatpush1.bf16.msra.mxu0 0
      %993 = vmatprep.subr.bf16.mxu0 0
      %994 = vmatpush1.bf16.msra.mxu0 0
      %995 = vmatprep.subr.bf16.mxu0 0
      %996 = vmatpush1.bf16.msra.mxu0 0
      %997 = vmatprep.subr.bf16.mxu0 0
      %998 = vmatpush1.bf16.msra.mxu0 0
      %999 = vmatprep.subr.bf16.mxu0 0
      %1000 = vmatpush1.bf16.msra.mxu0 0
      %1001 = vmatprep.subr.bf16.mxu0 0
      %1002 = vmatpush1.bf16.msra.mxu0 0
      %1003 = vmatprep.mubr.bf16.mxu0 0
      %1004 = vmatmul.mubr.bf16.gmra.mrb[0].mxu0 %v928
      %v1005 = vpop.f32.mrb[0].mxu0
      %v1006 = vadd.f32 0.0, %v1005
      %v1007 = vpop.f32.mrb[0].mxu0
      %v1008 = vadd.f32 0.0, %v1007
      %v1009 = vpop.f32.mrb[0].mxu0
      %v1010 = vpop.f32.mrb[0].mxu0
      %1011 = vdwg.mxu0
      %v1012 = vld [vmem:[%s197] sm:$0xff]
      %v1013 = vld [vmem:[%s197 + $0x8] sm:$0xff]
      %v1014 = vadd.f32 %v965, %v1012
      %v1015 = vadd.f32 %v967, %v1013
      %v1016 = vmax.f32 %v1014, 0.0
      %v1017 = vmax.f32 %v1015, 0.0
      %1018 = vst [vmem:[%s204] sm:$0xff] %v1016
      %1019 = vst [vmem:[%s204 + $0x8] sm:$0xff] %v1017
      %v1020 = vld [vmem:[%s372] sm:$0xff]
      %v1021 = vld [vmem:[%s372 + $0x8] sm:$0xff]
      %v1022 = vadd.f32 %v1006, %v1020
      %v1023 = vadd.f32 %v1008, %v1021
      %v1024 = vmax.f32 %v1022, 0.0
      %v1025 = vmax.f32 %v1023, 0.0
      %s1026 = scalar_lea.vmem %s204, 16
      %1027 = vst [vmem:[%s1026] sm:$0xff] %v1024
      %1028 = vst [vmem:[%s1026 + $0x8] sm:$0xff] %v1025
      %s1029 = smul.u32 2, %s15
      %p1030 = scmp.lt.s32.totalorder %s1029, 3
      %s1031 = scalar_select %p1030, %s1029, 3
      %s1032 = smul.addr %s1031, 2
      %s1033 = smul.addr %s1032, 8
      %s1034 = scalar_lea.vmem %s4, %s1033
      // Predicated region
      $region37: #{basic_block_pallas.1} parent=35 // pred_check
        %p1035 = pneg %p122
      $region38: #{basic_block_pallas.1} parent=35 // pred_check_branch
        %1037 = sbr.rel (%p1035) target = $region40
      $region39: #{basic_block_pallas.1} parent=35 // pred_region
        %s1038 = smul.u32 2, %s15
      $region40: #{basic_block_pallas.1} parent=35 // pred_fallthru
        _
    $region36: #{basic_block_pallas.1} parent=5 // pred_fallthru
      _
    %p1039 = scmp.le.s32.totalorder 2, %s10
    // Predicated region
    $region41: #{basic_block_pallas.1} parent=5 // pred_check
      %p1040 = pneg %p1039
    $region42: #{basic_block_pallas.1} parent=5 // pred_check_branch
      %1042 = sbr.rel (%p1040) target = $region44
    $region43: #{basic_block_pallas.1} parent=5 // pred_region
      %s1043 = ssub.s32 %s10, 2
      // Predicated region
      $region45: #{basic_block_pallas.1} parent=43 // pred_check
        %p1044 = pneg %p128
      $region46: #{basic_block_pallas.1} parent=43 // pred_check_branch
        %1046 = sbr.rel (%p1044) target = $region48
      $region47: #{basic_block_pallas.1} parent=43 // pred_region
        %s1047 = smul.u32 2, %s16
        %p1048 = scmp.lt.s32.totalorder %s1047, 3
        %s1049 = scalar_select %p1048, %s1047, 3
        %s1050 = smul.addr %s1049, 2
        %s1051 = smul.addr %s1050, 8
        %s1052 = scalar_lea.vmem %s4, %s1051
      $region48: #{basic_block_pallas.1} parent=43 // pred_fallthru
        _
    $region44: #{basic_block_pallas.1} parent=5 // pred_fallthru
      _
  $region6: #{basic_block_pallas.1} parent=0 // loop_footer
    %s14 = sadd.s32 1, %s10
  $region7: #{basic_block_pallas.1} parent=0 // loop_footer_branch
    %9 = sbr.rel target = $region3
  $region8: #{basic_block_pallas.1} parent=0 // loop_exit
    _

</llo_original>
